<compile_context>
chip_gen: v7x
topology: tpu7x:2x2x1
jax: 0.10.0
libtpu: 0.0.40
codegen_flags: <defaults>
</compile_context>

<pallas_src>
import jax
import jax.numpy as jnp
from jax.experimental import pallas as pl
from jax.experimental.pallas import tpu as pltpu

_MIB = 1 << 20


def metric_kernel(x1_ref, x2_ref, w_ref, out_ref):
    # Subtraction in f32 on the VPU (inputs may be bf16 or f32).
    diff = x1_ref[...].astype(jnp.float32) - x2_ref[...].astype(jnp.float32)
    # diff @ W on the MXU, operands fed in W's dtype (bf16 default for full
    # MXU rate on v5e/v6e/v7x); accumulation stays f32.
    dw = jnp.dot(diff.astype(w_ref.dtype), w_ref[...],
                 preferred_element_type=jnp.float32)
    # Row-wise quadratic form: VPU multiply + XLU lane reduction -> [tb, 1].
    q = jnp.sum(dw * diff, axis=-1, keepdims=True)
    # [tb, 1] -> lane-dense [1, tb] so the store is a full-lane unmasked vst
    # (except on the partial tail tile).  The tiny transpose rides the XLU,
    # which has slack next to the matmul/DMA.
    out_ref[...] = q.T


def _vmem_budget_bytes():
    # 75% of per-core VMEM capacity leaves headroom for compiler scratch.
    #   v5e/v6e: 128 MiB -> 96 MiB budget;   v7x: 64 MiB -> 48 MiB budget.
    try:
        cap = pltpu.get_tpu_info().vmem_capacity_bytes
    except Exception:
        cap = 64 * _MIB  # conservative (v7x) fallback
    return (cap * 3) // 4


def _round_up(x, m):
    return ((x + m - 1) // m) * m


def _pick_batch_tile(B, D, in_itemsize, w_itemsize, budget):
    """VMEM-budgeted batch tile (multiple of 256, capped at 2048)."""
    # Budget W at 2 buffers so the double-buffered fallback path also fits.
    w_bytes = 2 * D * D * w_itemsize
    avail = budget - w_bytes
    # Bytes per batch row: 2 inputs x 2 pipeline buffers x D, + 2 output bufs.
    per_row = 2 * 2 * D * in_itemsize + 2 * 4
    if avail < per_row * 256:
        # TODO(synk): for very large D (W no longer fits the VMEM budget,
        # e.g. D >~ 2048 bf16 on v7x's 64 MiB/TC), add a K-tiling grid axis
        # over D ('arbitrary' semantics) with an f32 accumulator.
        tb_max = 256
    else:
        tb_max = min(2048, ((avail // per_row) // 256) * 256)
    # Keep >= 2 grid steps where possible so the 'parallel' axis can shard
    # across v7x's two TensorCores; never exceed the (rounded-up) batch.
    tb_target = max(256, _round_up(pl.cdiv(B, 2), 256))
    return min(tb_max, tb_target)


def _build_pallas_call(B, D, tb, single_buffer_w, vmem_limit, cost):
    num_blocks = pl.cdiv(B, tb)
    if single_buffer_w:
        # W's index_map is constant -> it is DMA'd once; a single buffer
        # halves resident-W VMEM versus the default double buffer.
        w_spec = pl.BlockSpec((D, D), lambda i: (0, 0),
                              pipeline_mode=pl.Buffered(1))
    else:
        w_spec = pl.BlockSpec((D, D), lambda i: (0, 0))
    return pl.pallas_call(
        metric_kernel,
        out_shape=jax.ShapeDtypeStruct((1, B), jnp.float32),
        grid_spec=pltpu.PrefetchScalarGridSpec(
            num_scalar_prefetch=0,
            grid=(num_blocks,),
            in_specs=[
                pl.BlockSpec((tb, D), lambda i: (i, 0)),   # x1 tile (streamed)
                pl.BlockSpec((tb, D), lambda i: (i, 0)),   # x2 tile (streamed)
                w_spec,                                    # full W, resident
            ],
            out_specs=pl.BlockSpec((1, tb), lambda i: (0, i)),
        ),
        compiler_params=pltpu.CompilerParams(
            dimension_semantics=("parallel",),
            vmem_limit_bytes=int(vmem_limit),
        ),
        cost_estimate=cost,
    )


def metric_learning(x1, x2, w, *, tb=None, mxu_dtype=jnp.bfloat16,
                    vmem_budget_bytes=None):
    """Computes (x1 - x2)^T W (x1 - x2) per row.  Returns [B, 1] float32.

    x1, x2: [B, D].  bf16 inputs are accepted directly and are preferred when
        the producer already emits bf16 (this kernel is memory-bound, so they
        halve HBM traffic); the subtraction is always done in f32 in-kernel.
    w: [D, D] PSD metric.  Fed to the MXU in `mxu_dtype` (bf16 default — full
        MXU rate on v5e/v6e/v7x; pass jnp.float32 only if exact f32 math is
        required, the kernel is memory-bound either way).
    tb: batch tile (multiple of 256).  Default: auto-sized from the per-core
        VMEM budget (64 MiB on v7x vs 128 MiB on v5e/v6e, with headroom) and
        clamped so the 'parallel' grid keeps >= 2 steps for megacore.

    Note: with the bf16 MXU feed, results near zero can come out slightly
    negative despite W being PSD — clamp downstream if a sqrt is taken.
    """
    B, D = x1.shape
    assert x2.shape == (B, D) and w.shape == (D, D)

    # Tiny [D, D] cast; halves resident-W bytes when mxu_dtype is bf16.
    w = w.astype(mxu_dtype)
    in_itemsize = max(x1.dtype.itemsize, x2.dtype.itemsize)

    budget = (vmem_budget_bytes if vmem_budget_bytes is not None
              else _vmem_budget_bytes())
    if tb is None:
        tb = _pick_batch_tile(B, D, in_itemsize, w.dtype.itemsize, budget)

    cost = pl.CostEstimate(
        flops=2 * B * D * D + 3 * B * D,
        transcendentals=0,
        bytes_accessed=(B * D * (x1.dtype.itemsize + x2.dtype.itemsize)
                        + D * D * w.dtype.itemsize + B * 4),
    )

    # Prefer a single-buffered W block; fall back to the default pipeline
    # mode if this JAX build rejects pipeline_mode=pl.Buffered(1).
    out = None
    for single_buffer_w in (True, False):
        try:
            call = _build_pallas_call(B, D, tb, single_buffer_w, budget, cost)
            out = jax.block_until_ready(call(x1, x2, w))
            break
        except Exception:
            if not single_buffer_w:
                raise

    # out is already exactly (1, B): the partial tail block's out-of-bounds
    # lanes are masked on write by Pallas, so no garbage is exposed.
    return out[0].reshape(B, 1)


def metric_learning_ref(x1, x2, w):
    d = x1.astype(jnp.float32) - x2.astype(jnp.float32)
    return jnp.einsum("bd,de,be->b", d, w.astype(jnp.float32), d)[:, None]


def metric_learning_ref_bf16_feed(x1, x2, w):
    # Mirrors the kernel's bf16 MXU feed: operands rounded to bf16, f32 accum.
    d = x1.astype(jnp.float32) - x2.astype(jnp.float32)
    d_bf = d.astype(jnp.bfloat16).astype(jnp.float32)
    w_bf = w.astype(jnp.bfloat16).astype(jnp.float32)
    return jnp.sum((d_bf @ w_bf) * d, axis=-1, keepdims=True)


if __name__ == "__main__":
    key = jax.random.PRNGKey(0)
    k1, k2, k3 = jax.random.split(key, 3)

    # Small shapes; B deliberately NOT a multiple of the 256 tile (exercises
    # the masked partial tail block with no wrapper-side padding) and > 256
    # (so the 'parallel' grid has >= 2 steps).
    B, D = 300, 128
    x1 = jax.random.normal(k1, (B, D), dtype=jnp.float32)
    x2 = jax.random.normal(k2, (B, D), dtype=jnp.float32)

    # Deterministic positive semi-definite W = A @ A.T / D
    A = jax.random.normal(k3, (D, D), dtype=jnp.float32)
    W = (A @ A.T) / D

    ref = metric_learning_ref(x1, x2, W)

    # Exact-f32 MXU path.
    out_f32 = jax.block_until_ready(
        metric_learning(x1, x2, W, mxu_dtype=jnp.float32))
    assert out_f32.shape == (B, 1)
    assert jnp.allclose(out_f32, ref, rtol=1e-4, atol=1e-4), (out_f32, ref)

    # Default path: bf16-fed MXU (full rate on v5e/v6e/v7x), f32 accumulation.
    out_bf16 = jax.block_until_ready(metric_learning(x1, x2, W))
    ref_bf16 = metric_learning_ref_bf16_feed(x1, x2, W)
    assert out_bf16.shape == (B, 1)
    assert jnp.allclose(out_bf16, ref_bf16, rtol=1e-3, atol=1e-2), (
        out_bf16, ref_bf16)
    # Sanity: bf16-fed result stays within a few percent of the pure-f32 math.
    assert jnp.allclose(out_bf16, ref, rtol=1e-1, atol=2.0), (out_bf16, ref)

    # bf16 inputs accepted directly (halves the HBM stream of this
    # memory-bound kernel); subtraction still happens in f32 in-kernel.
    x1b = x1.astype(jnp.bfloat16)
    x2b = x2.astype(jnp.bfloat16)
    out_bin = jax.block_until_ready(metric_learning(x1b, x2b, W))
    ref_bin = metric_learning_ref_bf16_feed(x1b, x2b, W)
    assert out_bin.shape == (B, 1)
    assert jnp.allclose(out_bin, ref_bin, rtol=1e-3, atol=1e-2), (
        out_bin, ref_bin)

    print("KERNEL_OK")
</pallas_src>

<mosaic_0001>
module attributes {stable_mosaic.version = 11 : i64} {
  func.func @metric_kernel(%arg0: i32, %arg1: memref<256x128xf32, #tpu.memory_space<vmem>>, %arg2: memref<256x128xf32, #tpu.memory_space<vmem>>, %arg3: memref<128x128xf32, #tpu.memory_space<vmem>>, %arg4: memref<1x256xf32, #tpu.memory_space<vmem>>) attributes {dimension_semantics = [#tpu.dimension_semantics<parallel>], iteration_bounds = array<i64: 2>, scalar_prefetch = 0 : i64, scratch_operands = 0 : i64, tpu.core_type = #tpu.core_type<tc>, window_params = [{transform_indices = @transform_0, window_bounds = array<i64: 256, 128>}, {transform_indices = @transform_1, window_bounds = array<i64: 256, 128>}, {pipeline_mode = #tpu.pipeline_mode<synchronous>, transform_indices = @transform_2, window_bounds = array<i64: 128, 128>}, {transform_indices = @transform_3, window_bounds = array<i64: 1, 256>}]} {
    %c0 = arith.constant 0 : index
    %c0_0 = arith.constant 0 : index
    %0 = vector.load %arg1[%c0, %c0_0] : memref<256x128xf32, #tpu.memory_space<vmem>>, vector<256x128xf32>
    %c0_1 = arith.constant 0 : index
    %c0_2 = arith.constant 0 : index
    %1 = vector.load %arg2[%c0_1, %c0_2] : memref<256x128xf32, #tpu.memory_space<vmem>>, vector<256x128xf32>
    %2 = arith.subf %0, %1 : vector<256x128xf32>
    %c0_3 = arith.constant 0 : index
    %c0_4 = arith.constant 0 : index
    %3 = vector.load %arg3[%c0_3, %c0_4] : memref<128x128xf32, #tpu.memory_space<vmem>>, vector<128x128xf32>
    %cst = arith.constant dense<0.000000e+00> : vector<256x128xf32>
    %4 = tpu.matmul %2, %3, %cst {dimension_numbers = #tpu.dot_dimension_numbers<[1], [0], [0], [1], [0, 0, 1, 1], [], []>} : vector<256x128xf32>, vector<128x128xf32>, vector<256x128xf32> -> vector<256x128xf32>
    %5 = arith.mulf %4, %2 : vector<256x128xf32>
    %cst_5 = arith.constant dense<0.000000e+00> : vector<256xf32>
    %6 = vector.multi_reduction <add>, %5, %cst_5 [1] : vector<256x128xf32> to vector<256xf32>
    %7 = vector.shape_cast %6 : vector<256xf32> to vector<256x1xf32>
    %8 = tpu.transpose %7, [1, 0] : vector<256x1xf32> -> vector<1x256xf32>
    %c0_6 = arith.constant 0 : index
    %c0_7 = arith.constant 0 : index
    %9 = vector.load %arg4[%c0_6, %c0_7] : memref<1x256xf32, #tpu.memory_space<vmem>>, vector<1x256xf32>
    tpu.vector_store %arg4[%c0_6, %c0_7], %8 {strides = array<i32>} : memref<1x256xf32, #tpu.memory_space<vmem>>, vector<1x256xf32>,
    return
  }
  func.func @transform_0(%arg0: i32) -> (i32, i32) {
    %c0_i32 = arith.constant 0 : i32
    %c0_i32_0 = arith.constant 0 : i32
    return %arg0, %c0_i32 : i32, i32
  }
  func.func @transform_1(%arg0: i32) -> (i32, i32) {
    %c0_i32 = arith.constant 0 : i32
    %c0_i32_0 = arith.constant 0 : i32
    return %arg0, %c0_i32 : i32, i32
  }
  func.func @transform_2(%arg0: i32) -> (i32, i32) {
    %c0_i32 = arith.constant 0 : i32
    %c0_i32_0 = arith.constant 0 : i32
    %c0_i32_1 = arith.constant 0 : i32
    return %c0_i32, %c0_i32_0 : i32, i32
  }
  func.func @transform_3(%arg0: i32) -> (i32, i32) {
    %c0_i32 = arith.constant 0 : i32
    %c0_i32_0 = arith.constant 0 : i32
    return %c0_i32, %arg0 : i32, i32
  }
}

module attributes {stable_mosaic.version = 11 : i64} {
  func.func @metric_kernel(%arg0: i32, %arg1: memref<256x128xf32, #tpu.memory_space<vmem>>, %arg2: memref<256x128xf32, #tpu.memory_space<vmem>>, %arg3: memref<128x128xf32, #tpu.memory_space<vmem>>, %arg4: memref<1x256xf32, #tpu.memory_space<vmem>>) attributes {dimension_semantics = [#tpu.dimension_semantics<parallel>], iteration_bounds = array<i64: 2>, scalar_prefetch = 0 : i64, scratch_operands = 0 : i64, tpu.core_type = #tpu.core_type<tc>, window_params = [{transform_indices = @transform_0, window_bounds = array<i64: 256, 128>}, {transform_indices = @transform_1, window_bounds = array<i64: 256, 128>}, {pipeline_mode = #tpu.pipeline_mode<synchronous>, transform_indices = @transform_2, window_bounds = array<i64: 128, 128>}, {transform_indices = @transform_3, window_bounds = array<i64: 1, 256>}]} {
    %c0 = arith.constant 0 : index
    %c0_0 = arith.constant 0 : index
    %0 = vector.load %arg1[%c0, %c0_0] : memref<256x128xf32, #tpu.memory_space<vmem>>, vector<256x128xf32>
    %c0_1 = arith.constant 0 : index
    %c0_2 = arith.constant 0 : index
    %1 = vector.load %arg2[%c0_1, %c0_2] : memref<256x128xf32, #tpu.memory_space<vmem>>, vector<256x128xf32>
    %2 = arith.subf %0, %1 : vector<256x128xf32>
    %c0_3 = arith.constant 0 : index
    %c0_4 = arith.constant 0 : index
    %3 = vector.load %arg3[%c0_3, %c0_4] : memref<128x128xf32, #tpu.memory_space<vmem>>, vector<128x128xf32>
    %cst = arith.constant dense<0.000000e+00> : vector<256x128xf32>
    %4 = tpu.matmul %2, %3, %cst {dimension_numbers = #tpu.dot_dimension_numbers<[1], [0], [0], [1], [0, 0, 1, 1], [], []>} : vector<256x128xf32>, vector<128x128xf32>, vector<256x128xf32> -> vector<256x128xf32>
    %5 = arith.mulf %4, %2 : vector<256x128xf32>
    %cst_5 = arith.constant dense<0.000000e+00> : vector<256xf32>
    %6 = vector.multi_reduction <add>, %5, %cst_5 [1] : vector<256x128xf32> to vector<256xf32>
    %7 = vector.shape_cast %6 : vector<256xf32> to vector<256x1xf32>
    %8 = tpu.transpose %7, [1, 0] : vector<256x1xf32> -> vector<1x256xf32>
    %c0_6 = arith.constant 0 : index
    %c0_7 = arith.constant 0 : index
    %9 = vector.load %arg4[%c0_6, %c0_7] : memref<1x256xf32, #tpu.memory_space<vmem>>, vector<1x256xf32>
    tpu.vector_store %arg4[%c0_6, %c0_7], %8 {strides = array<i32>} : memref<1x256xf32, #tpu.memory_space<vmem>>, vector<1x256xf32>,
    return
  }
  func.func @transform_0(%arg0: i32) -> (i32, i32) {
    %c0_i32 = arith.constant 0 : i32
    %c0_i32_0 = arith.constant 0 : i32
    return %arg0, %c0_i32 : i32, i32
  }
  func.func @transform_1(%arg0: i32) -> (i32, i32) {
    %c0_i32 = arith.constant 0 : i32
    %c0_i32_0 = arith.constant 0 : i32
    return %arg0, %c0_i32 : i32, i32
  }
  func.func @transform_2(%arg0: i32) -> (i32, i32) {
    %c0_i32 = arith.constant 0 : i32
    %c0_i32_0 = arith.constant 0 : i32
    %c0_i32_1 = arith.constant 0 : i32
    return %c0_i32, %c0_i32_0 : i32, i32
  }
  func.func @transform_3(%arg0: i32) -> (i32, i32) {
    %c0_i32 = arith.constant 0 : i32
    %c0_i32_0 = arith.constant 0 : i32
    return %c0_i32, %arg0 : i32, i32
  }
}

</mosaic_0001>

<llo_original>
// kernel: tpu_custom_call.1
$region0: #{tpu_custom_call.1}
  #allocation0 [shape = 'u32[]', space=smem, size = 0x4, offset = 0x4, fixed_abs, tag = 'smem constant byte address 0x4 - core index']
  #allocation1 [shape = 'u32[144,128]{1,0:T(1,128)}', space=vmem, size = 0x12000, scoped, tag = 'internal scratch']
  %s0 = inlined_call_operand.hbm [shape: f32[300,128], index: 0, kind: input, shape index: {}]
  %s1 = inlined_call_operand.hbm [shape: f32[300,128], index: 1, kind: input, shape index: {}]
  %s2 = inlined_call_operand.hbm [shape: f32[128,128], index: 2, kind: input, shape index: {}]
  %s3 = inlined_call_operand.hbm [shape: f32[1,300], index: 3, kind: output, shape index: {}]
  %s4 = sld [smem:[#allocation0]]
  $region57: #{tpu_custom_call.1} parent=0
    _
  %s6 = ssub.s32 1, %s4
  %s7 = scalar_select 0, %s6, %s4
  $region1: #{tpu_custom_call.1} parent=0
    #allocation2 [shape = 'u8[262144]{0}', space=vmem, size = 0x40000, scoped, tag = 'input window, operand 0']
    #allocation3 [shape = 's32[2]{0}', space=sflag, size = 0x8, scoped, tag = 'scoped memory for tpu_custom_call.1']
    #allocation4 [shape = 's32[2]{0}', space=sflag, size = 0x8, scoped, tag = 'scoped memory for tpu_custom_call.1']
    #allocation5 [shape = 'u8[262144]{0}', space=vmem, size = 0x40000, scoped, tag = 'input window, operand 1']
    #allocation6 [shape = 's32[2]{0}', space=sflag, size = 0x8, scoped, tag = 'scoped memory for tpu_custom_call.1']
    #allocation7 [shape = 'u8[65536]{0}', space=vmem, size = 0x10000, scoped, tag = 'input window, operand 2, single buffered']
    #allocation8 [shape = 'u8[2048]{0}', space=vmem, size = 0x800, scoped, tag = 'output window, operand 0']
    %8 = vsyncpa [#allocation3], 0
    %s9 = scalar_lea.sflag [#allocation3], 1
    %10 = vsyncpa %s9, 0
    %11 = vsyncpa [#allocation6], 0
    %s12 = scalar_lea.sflag [#allocation6], 1
    %13 = vsyncpa %s12, 0
    %14 = vsyncpa [#allocation4], 0
    %s15 = scalar_lea.sflag [#allocation4], 1
    %16 = vsyncpa %s15, 0
    loop: start=0, step=1, limit=4
    $region2: #{tpu_custom_call.1} parent=1 // loop_pre_header
      _
    $region3: #{tpu_custom_call.1} parent=1 // loop_header
      %s18 = sphi 0, %s22
      %p19 = scmp.ge.s32.totalorder %s18, 4
      %s28 = sphi 0, %s30
      %s31 = sphi 0, %s28
      %s32 = sphi 0, %s31
      %s48 = sphi 0, %s32
      %s54 = sphi 0, %s56
      %s57 = sphi 0, %s54
      %s58 = sphi 0, %s57
      %s74 = sphi 0, %s58
      %s78 = sphi 0, %s78
      %s80 = sphi 0, %s78
      %s81 = sphi 0, %s80
      %s95 = sphi 0, %s81
      %s101 = sphi 0, %s103
      %s104 = sphi 0, %s101
      %s105 = sphi 0, %s104
      %s121 = sphi 0, %s105
    $region4: #{tpu_custom_call.1} parent=1 // loop_header_branch
      %21 = sbr.rel (%p19) target = $region8
    $region5: #{tpu_custom_call.1} parent=1 // loop_body
      %s23 = ssub.s32 %s18, 1
      %s24 = ssub.s32 %s18, 2
      %s25 = sadd.s32 %s18, 1
      %s26 = ssub.s32 %s18, %s25
      %p27 = scmp.eq.s32.totalorder %s26, 0
      %s29 = sadd.s32 %s28, 1
      %s30 = scalar_select %p27, %s28, %s29
      %p33 = pneg %p27
      %p34 = scmp.eq.s32.totalorder %s18, 1
      %p35 = por %p33, %p34
      %p36 = scmp.ne.s32.totalorder %s28, %s31
      %p37 = scmp.eq.s32.totalorder %s18, 0
      %p38 = por %p36, %p37
      %p39 = scmp.ne.s32.totalorder %s28, %s31
      %p40 = scmp.eq.s32.totalorder %s23, 1
      %p41 = por %p39, %p40
      %p42 = scmp.ne.s32.totalorder %s31, %s32
      %p43 = scmp.eq.s32.totalorder %s23, 0
      %p44 = por %p42, %p43
      %p45 = scmp.ne.s32.totalorder %s31, %s32
      %p46 = scmp.eq.s32.totalorder %s24, 1
      %p47 = por %p45, %p46
      %p49 = scmp.ne.s32.totalorder %s32, %s48
      %p50 = scmp.eq.s32.totalorder %s24, 0
      %p51 = por %p49, %p50
      %s52 = ssub.s32 %s18, %s25
      %p53 = scmp.eq.s32.totalorder %s52, 0
      %s55 = sadd.s32 %s54, 1
      %s56 = scalar_select %p53, %s54, %s55
      %p59 = pneg %p53
      %p60 = scmp.eq.s32.totalorder %s18, 1
      %p61 = por %p59, %p60
      %p62 = scmp.ne.s32.totalorder %s54, %s57
      %p63 = scmp.eq.s32.totalorder %s18, 0
      %p64 = por %p62, %p63
      %p65 = scmp.ne.s32.totalorder %s54, %s57
      %p66 = scmp.eq.s32.totalorder %s23, 1
      %p67 = por %p65, %p66
      %p68 = scmp.ne.s32.totalorder %s57, %s58
      %p69 = scmp.eq.s32.totalorder %s23, 0
      %p70 = por %p68, %p69
      %p71 = scmp.ne.s32.totalorder %s57, %s58
      %p72 = scmp.eq.s32.totalorder %s24, 1
      %p73 = por %p71, %p72
      %p75 = scmp.ne.s32.totalorder %s58, %s74
      %p76 = scmp.eq.s32.totalorder %s24, 0
      %p77 = por %p75, %p76
      %s79 = sadd.s32 %s78, 1
      %p82 = scmp.eq.s32.totalorder %s18, 1
      %p83 = scmp.ne.s32.totalorder %s78, %s80
      %p84 = scmp.eq.s32.totalorder %s18, 0
      %p85 = por %p83, %p84
      %p86 = scmp.ne.s32.totalorder %s78, %s80
      %p87 = scmp.eq.s32.totalorder %s23, 1
      %p88 = por %p86, %p87
      %p89 = scmp.ne.s32.totalorder %s80, %s81
      %p90 = scmp.eq.s32.totalorder %s23, 0
      %p91 = por %p89, %p90
      %p92 = scmp.ne.s32.totalorder %s80, %s81
      %p93 = scmp.eq.s32.totalorder %s24, 1
      %p94 = por %p92, %p93
      %p96 = scmp.ne.s32.totalorder %s81, %s95
      %p97 = scmp.eq.s32.totalorder %s24, 0
      %p98 = por %p96, %p97
      %s99 = ssub.s32 %s18, %s25
      %p100 = scmp.eq.s32.totalorder %s99, 0
      %s102 = sadd.s32 %s101, 1
      %s103 = scalar_select %p100, %s101, %s102
      %p106 = pneg %p100
      %p107 = scmp.eq.s32.totalorder %s18, 1
      %p108 = por %p106, %p107
      %p109 = scmp.ne.s32.totalorder %s101, %s104
      %p110 = scmp.eq.s32.totalorder %s18, 0
      %p111 = por %p109, %p110
      %p112 = scmp.ne.s32.totalorder %s101, %s104
      %p113 = scmp.eq.s32.totalorder %s23, 1
      %p114 = por %p112, %p113
      %p115 = scmp.ne.s32.totalorder %s104, %s105
      %p116 = scmp.eq.s32.totalorder %s23, 0
      %p117 = por %p115, %p116
      %p118 = scmp.ne.s32.totalorder %s104, %s105
      %p119 = scmp.eq.s32.totalorder %s24, 1
      %p120 = por %p118, %p119
      %p122 = scmp.ne.s32.totalorder %s105, %s121
      %p123 = scmp.eq.s32.totalorder %s24, 0
      %p124 = por %p122, %p123
      %p125 = scmp.le.s32.totalorder 1, %s18
      %p126 = scmp.lt.s32.totalorder %s18, 3
      %p127 = pnand %p125, %p126
      %p128 = pneg %p127
      // Predicated region
      $region9: #{tpu_custom_call.1} parent=5 // pred_check
        _
      $region10: #{tpu_custom_call.1} parent=5 // pred_check_branch
        %130 = sbr.rel (%p127) target = $region12
      $region11: #{tpu_custom_call.1} parent=5 // pred_region
        %s131 = ssub.s32 %s18, 1
        // Predicated region
        $region13: #{tpu_custom_call.1} parent=11 // pred_check
          %p132 = pneg %p91
        $region14: #{tpu_custom_call.1} parent=11 // pred_check_branch
          %134 = sbr.rel (%p132) target = $region16
        $region15: #{tpu_custom_call.1} parent=11 // pred_region
          %s136 = ssub.s32 2048, 2048
          %137 = vsyncadd [#allocation6], %s136
          %s138 = sshll.u32 [#allocation7], 4
          %s139 = int_to_ptr.vmem [resolvable:$true] %s138
          %144 = dma.hbm_to_vmem [thread:$0]  %s2, 2048, %s139, [#allocation6], 128, 128, 8
        $region16: #{tpu_custom_call.1} parent=11 // pred_fallthru
          _
      $region12: #{tpu_custom_call.1} parent=5 // pred_fallthru
        _
      %p145 = scmp.lt.s32.totalorder %s18, 2
      // Predicated region
      $region17: #{tpu_custom_call.1} parent=5 // pred_check
        %p146 = pneg %p145
      $region18: #{tpu_custom_call.1} parent=5 // pred_check_branch
        %148 = sbr.rel (%p146) target = $region20
      $region19: #{tpu_custom_call.1} parent=5 // pred_region
        // Predicated region
        $region21: #{tpu_custom_call.1} parent=19 // pred_check
          %p149 = pneg %p38
        $region22: #{tpu_custom_call.1} parent=19 // pred_check_branch
          %151 = sbr.rel (%p149) target = $region24
        $region23: #{tpu_custom_call.1} parent=19 // pred_region
          %s152 = sand.u32 %s28, 1
          %s153 = scalar_lea.sflag [#allocation3], %s152
          %s154 = sand.u32 %s28, 1
          %s155 = smul.addr %s154, 256
          %s156 = scalar_lea.vmem [#allocation2], %s155
          %s157 = smul.u32 32, %s18
          %s158 = ssub.s32 38, %s157
          %p159 = scmp.lt.s32.totalorder %s158, 32
          %s160 = scalar_select %p159, %s158, 32
          %s161 = smul.u32 128, %s160
          %s163 = ssub.s32 4096, %s161
          %164 = vsyncadd %s153, %s163
          %p165 = scmp.ne.s32.totalorder 0, %s161
          %s166 = smul.addr %s157, 128
          %s167 = scalar_lea.hbm %s0, %s166
          %s168 = smul.u32 8, %s160
          %s169 = sshll.u32 %s156, 4
          %s170 = int_to_ptr.vmem [resolvable:$true] %s169
          %s171 = sshll.u32 %s168, 4
          %175 = dma.hbm_to_vmem [thread:$0]  (%p165), %s167, %s171, %s170, %s153, 128, 128, 8
        $region24: #{tpu_custom_call.1} parent=19 // pred_fallthru
          _
        // Predicated region
        $region25: #{tpu_custom_call.1} parent=19 // pred_check
          %p176 = pneg %p64
        $region26: #{tpu_custom_call.1} parent=19 // pred_check_branch
          %178 = sbr.rel (%p176) target = $region28
        $region27: #{tpu_custom_call.1} parent=19 // pred_region
          %s179 = sand.u32 %s18, 1
          %s180 = scalar_lea.sflag [#allocation6], %s179
          %s181 = sand.u32 %s54, 1
          %s182 = smul.addr %s181, 256
          %s183 = scalar_lea.vmem [#allocation5], %s182
          %s184 = smul.u32 32, %s18
          %s185 = ssub.s32 38, %s184
          %p186 = scmp.lt.s32.totalorder %s185, 32
          %s187 = scalar_select %p186, %s185, 32
          %s188 = smul.u32 128, %s187
          %s190 = ssub.s32 4096, %s188
          %191 = vsyncadd %s180, %s190
          %p192 = scmp.ne.s32.totalorder 0, %s188
          %s193 = smul.addr %s184, 128
          %s194 = scalar_lea.hbm %s1, %s193
          %s195 = smul.u32 8, %s187
          %s196 = sshll.u32 %s183, 4
          %s197 = int_to_ptr.vmem [resolvable:$true] %s196
          %s198 = sshll.u32 %s195, 4
          %202 = dma.hbm_to_vmem [thread:$0]  (%p192), %s194, %s198, %s197, %s180, 128, 128, 8
        $region28: #{tpu_custom_call.1} parent=19 // pred_fallthru
          _
      $region20: #{tpu_custom_call.1} parent=5 // pred_fallthru
        _
      %p203 = scmp.le.s32.totalorder 1, %s18
      %p204 = scmp.lt.s32.totalorder %s18, 3
      %p205 = pnand %p203, %p204
      %p206 = pneg %p205
      // Predicated region
      $region29: #{tpu_custom_call.1} parent=5 // pred_check
        _
      $region30: #{tpu_custom_call.1} parent=5 // pred_check_branch
        %208 = sbr.rel (%p205) target = $region32
      $region31: #{tpu_custom_call.1} parent=5 // pred_region
        %s209 = ssub.s32 %s18, 1
        %s210 = sand.u32 %s31, 1
        %s211 = scalar_lea.sflag [#allocation3], %s210
        %s212 = sand.u32 %s31, 1
        %s213 = smul.addr %s212, 256
        %s214 = scalar_lea.vmem [#allocation2], %s213
        // Predicated region
        $region33: #{tpu_custom_call.1} parent=31 // pred_check
          %p215 = pneg %p44
        $region34: #{tpu_custom_call.1} parent=31 // pred_check_branch
          %217 = sbr.rel (%p215) target = $region36
        $region35: #{tpu_custom_call.1} parent=31 // pred_region
          %218 = dma.done %s211, 4096
        $region36: #{tpu_custom_call.1} parent=31 // pred_fallthru
          _
        %s219 = sand.u32 %s23, 1
        %s220 = scalar_lea.sflag [#allocation6], %s219
        %s221 = sand.u32 %s57, 1
        %s222 = smul.addr %s221, 256
        %s223 = scalar_lea.vmem [#allocation5], %s222
        // Predicated region
        $region37: #{tpu_custom_call.1} parent=31 // pred_check
          %p224 = pneg %p70
        $region38: #{tpu_custom_call.1} parent=31 // pred_check_branch
          %226 = sbr.rel (%p224) target = $region40
        $region39: #{tpu_custom_call.1} parent=31 // pred_region
          %227 = dma.done %s220, 4096
        $region40: #{tpu_custom_call.1} parent=31 // pred_fallthru
          _
        // Predicated region
        $region41: #{tpu_custom_call.1} parent=31 // pred_check
          %p228 = pneg %p91
        $region42: #{tpu_custom_call.1} parent=31 // pred_check_branch
          %230 = sbr.rel (%p228) target = $region44
        $region43: #{tpu_custom_call.1} parent=31 // pred_region
          %231 = dma.done [#allocation6], 2048
        $region44: #{tpu_custom_call.1} parent=31 // pred_fallthru
          _
        %s232 = sand.u32 %s31, 1
        %s233 = scalar_lea.sflag [#allocation3], %s232
        %s234 = sand.u32 %s31, 1
        %s235 = smul.addr %s234, 256
        %s236 = scalar_lea.vmem [#allocation2], %s235
        %p237 = pneg %p44
        %p238 = pneg %p41
        %s239 = sand.u32 %s23, 1
        %s240 = scalar_lea.sflag [#allocation6], %s239
        %s241 = sand.u32 %s57, 1
        %s242 = smul.addr %s241, 256
        %s243 = scalar_lea.vmem [#allocation5], %s242
        %p244 = pneg %p70
        %p245 = pneg %p67
        %p246 = pneg %p91
        %p247 = pneg %p88
        %p248 = pneg %p117
        %p249 = pneg %p114
        %s250 = sand.u32 %s104, 1
        %s251 = scalar_lea.sflag [#allocation4], %s250
        %s252 = sand.u32 %s104, 1
        %s253 = smul.addr %s252, 2
        %s254 = scalar_lea.vmem [#allocation8], %s253
        %s255 = smul.u32 32, %s23
        %s256 = ssub.s32 38, %s255
        %p257 = scmp.lt.s32.totalorder %s256, 32
        %s258 = scalar_select %p257, %s256, 32
        %s259 = smul.u32 128, %s258
        %s260 = smul.u32 32, %s23
        %s261 = ssub.s32 38, %s260
        %p262 = scmp.lt.s32.totalorder %s261, 32
        %s263 = scalar_select %p262, %s261, 32
        %s264 = smul.u32 128, %s263
        %s265 = smul.u32 2, %s23
        %s266 = ssub.s32 3, %s265
        %p267 = scmp.lt.s32.totalorder %s266, 2
        %s268 = scalar_select %p267, %s266, 2
        %s269 = smul.u32 16, %s268
        %v270 = vld [vmem:[%s214] sm:$0xff]
        %v271 = vld [vmem:[%s214 + $0x8] sm:$0xff]
        %v272 = vld [vmem:[%s214 + $0x10] sm:$0xff]
        %v273 = vld [vmem:[%s214 + $0x18] sm:$0xff]
        %v274 = vld [vmem:[%s214 + $0x20] sm:$0xff]
        %v275 = vld [vmem:[%s214 + $0x28] sm:$0xff]
        %v276 = vld [vmem:[%s214 + $0x30] sm:$0xff]
        %v277 = vld [vmem:[%s214 + $0x38] sm:$0xff]
        %v278 = vld [vmem:[%s214 + $0x40] sm:$0xff]
        %v279 = vld [vmem:[%s214 + $0x48] sm:$0xff]
        %v280 = vld [vmem:[%s214 + $0x50] sm:$0xff]
        %v281 = vld [vmem:[%s214 + $0x58] sm:$0xff]
        %v282 = vld [vmem:[%s214 + $0x60] sm:$0xff]
        %v283 = vld [vmem:[%s214 + $0x68] sm:$0xff]
        %v284 = vld [vmem:[%s214 + $0x70] sm:$0xff]
        %v285 = vld [vmem:[%s214 + $0x78] sm:$0xff]
        %v286 = vld [vmem:[%s214 + $0x80] sm:$0xff]
        %v287 = vld [vmem:[%s214 + $0x88] sm:$0xff]
        %v288 = vld [vmem:[%s214 + $0x90] sm:$0xff]
        %v289 = vld [vmem:[%s214 + $0x98] sm:$0xff]
        %v290 = vld [vmem:[%s214 + $0xa0] sm:$0xff]
        %v291 = vld [vmem:[%s214 + $0xa8] sm:$0xff]
        %v292 = vld [vmem:[%s214 + $0xb0] sm:$0xff]
        %v293 = vld [vmem:[%s214 + $0xb8] sm:$0xff]
        %v294 = vld [vmem:[%s214 + $0xc0] sm:$0xff]
        %v295 = vld [vmem:[%s214 + $0xc8] sm:$0xff]
        %v296 = vld [vmem:[%s214 + $0xd0] sm:$0xff]
        %v297 = vld [vmem:[%s214 + $0xd8] sm:$0xff]
        %v298 = vld [vmem:[%s214 + $0xe0] sm:$0xff]
        %v299 = vld [vmem:[%s214 + $0xe8] sm:$0xff]
        %v300 = vld [vmem:[%s214 + $0xf0] sm:$0xff]
        %v301 = vld [vmem:[%s214 + $0xf8] sm:$0xff]
        %v302 = vld [vmem:[%s223] sm:$0xff]
        %v303 = vld [vmem:[%s223 + $0x8] sm:$0xff]
        %v304 = vld [vmem:[%s223 + $0x10] sm:$0xff]
        %v305 = vld [vmem:[%s223 + $0x18] sm:$0xff]
        %v306 = vld [vmem:[%s223 + $0x20] sm:$0xff]
        %v307 = vld [vmem:[%s223 + $0x28] sm:$0xff]
        %v308 = vld [vmem:[%s223 + $0x30] sm:$0xff]
        %v309 = vld [vmem:[%s223 + $0x38] sm:$0xff]
        %v310 = vld [vmem:[%s223 + $0x40] sm:$0xff]
        %v311 = vld [vmem:[%s223 + $0x48] sm:$0xff]
        %v312 = vld [vmem:[%s223 + $0x50] sm:$0xff]
        %v313 = vld [vmem:[%s223 + $0x58] sm:$0xff]
        %v314 = vld [vmem:[%s223 + $0x60] sm:$0xff]
        %v315 = vld [vmem:[%s223 + $0x68] sm:$0xff]
        %v316 = vld [vmem:[%s223 + $0x70] sm:$0xff]
        %v317 = vld [vmem:[%s223 + $0x78] sm:$0xff]
        %v318 = vld [vmem:[%s223 + $0x80] sm:$0xff]
        %v319 = vld [vmem:[%s223 + $0x88] sm:$0xff]
        %v320 = vld [vmem:[%s223 + $0x90] sm:$0xff]
        %v321 = vld [vmem:[%s223 + $0x98] sm:$0xff]
        %v322 = vld [vmem:[%s223 + $0xa0] sm:$0xff]
        %v323 = vld [vmem:[%s223 + $0xa8] sm:$0xff]
        %v324 = vld [vmem:[%s223 + $0xb0] sm:$0xff]
        %v325 = vld [vmem:[%s223 + $0xb8] sm:$0xff]
        %v326 = vld [vmem:[%s223 + $0xc0] sm:$0xff]
        %v327 = vld [vmem:[%s223 + $0xc8] sm:$0xff]
        %v328 = vld [vmem:[%s223 + $0xd0] sm:$0xff]
        %v329 = vld [vmem:[%s223 + $0xd8] sm:$0xff]
        %v330 = vld [vmem:[%s223 + $0xe0] sm:$0xff]
        %v331 = vld [vmem:[%s223 + $0xe8] sm:$0xff]
        %v332 = vld [vmem:[%s223 + $0xf0] sm:$0xff]
        %v333 = vld [vmem:[%s223 + $0xf8] sm:$0xff]
        %v334 = vsub.f32 %v270, %v302
        %v335 = vsub.f32 %v271, %v303
        %v336 = vsub.f32 %v272, %v304
        %v337 = vsub.f32 %v273, %v305
        %v338 = vsub.f32 %v274, %v306
        %v339 = vsub.f32 %v275, %v307
        %v340 = vsub.f32 %v276, %v308
        %v341 = vsub.f32 %v277, %v309
        %v342 = vsub.f32 %v278, %v310
        %v343 = vsub.f32 %v279, %v311
        %v344 = vsub.f32 %v280, %v312
        %v345 = vsub.f32 %v281, %v313
        %v346 = vsub.f32 %v282, %v314
        %v347 = vsub.f32 %v283, %v315
        %v348 = vsub.f32 %v284, %v316
        %v349 = vsub.f32 %v285, %v317
        %v350 = vsub.f32 %v286, %v318
        %v351 = vsub.f32 %v287, %v319
        %v352 = vsub.f32 %v288, %v320
        %v353 = vsub.f32 %v289, %v321
        %v354 = vsub.f32 %v290, %v322
        %v355 = vsub.f32 %v291, %v323
        %v356 = vsub.f32 %v292, %v324
        %v357 = vsub.f32 %v293, %v325
        %v358 = vsub.f32 %v294, %v326
        %v359 = vsub.f32 %v295, %v327
        %v360 = vsub.f32 %v296, %v328
        %v361 = vsub.f32 %v297, %v329
        %v362 = vsub.f32 %v298, %v330
        %v363 = vsub.f32 %v299, %v331
        %v364 = vsub.f32 %v300, %v332
        %v365 = vsub.f32 %v301, %v333
        %v366 = vld [vmem:[#allocation7] sm:$0xff]
        %v367 = vld [vmem:[#allocation7 + $0x8] sm:$0xff]
        %v368 = vld [vmem:[#allocation7 + $0x10] sm:$0xff]
        %v369 = vld [vmem:[#allocation7 + $0x18] sm:$0xff]
        %v370 = vld [vmem:[#allocation7 + $0x20] sm:$0xff]
        %v371 = vld [vmem:[#allocation7 + $0x28] sm:$0xff]
        %v372 = vld [vmem:[#allocation7 + $0x30] sm:$0xff]
        %v373 = vld [vmem:[#allocation7 + $0x38] sm:$0xff]
        %v374 = vld [vmem:[#allocation7 + $0x40] sm:$0xff]
        %v375 = vld [vmem:[#allocation7 + $0x48] sm:$0xff]
        %v376 = vld [vmem:[#allocation7 + $0x50] sm:$0xff]
        %v377 = vld [vmem:[#allocation7 + $0x58] sm:$0xff]
        %v378 = vld [vmem:[#allocation7 + $0x60] sm:$0xff]
        %v379 = vld [vmem:[#allocation7 + $0x68] sm:$0xff]
        %v380 = vld [vmem:[#allocation7 + $0x70] sm:$0xff]
        %v381 = vld [vmem:[#allocation7 + $0x78] sm:$0xff]
        %382 = vmatprep.subr.mxu0 0.0
        %383 = vmatpush1.msra.mxu0 %v366
        %384 = vmatprep.subr.mxu0 0.0
        %385 = vmatpush1.msra.mxu0 %v367
        %386 = vmatprep.subr.mxu0 0.0
        %387 = vmatpush1.msra.mxu0 %v368
        %388 = vmatprep.subr.mxu0 0.0
        %389 = vmatpush1.msra.mxu0 %v369
        %390 = vmatprep.subr.mxu0 0.0
        %391 = vmatpush1.msra.mxu0 %v370
        %392 = vmatprep.subr.mxu0 0.0
        %393 = vmatpush1.msra.mxu0 %v371
        %394 = vmatprep.subr.mxu0 0.0
        %395 = vmatpush1.msra.mxu0 %v372
        %396 = vmatprep.subr.mxu0 0.0
        %397 = vmatpush1.msra.mxu0 %v373
        %398 = vmatprep.subr.mxu0 0.0
        %399 = vmatpush1.msra.mxu0 %v374
        %400 = vmatprep.subr.mxu0 0.0
        %401 = vmatpush1.msra.mxu0 %v375
        %402 = vmatprep.subr.mxu0 0.0
        %403 = vmatpush1.msra.mxu0 %v376
        %404 = vmatprep.subr.mxu0 0.0
        %405 = vmatpush1.msra.mxu0 %v377
        %406 = vmatprep.subr.mxu0 0.0
        %407 = vmatpush1.msra.mxu0 %v378
        %408 = vmatprep.subr.mxu0 0.0
        %409 = vmatpush1.msra.mxu0 %v379
        %410 = vmatprep.subr.mxu0 0.0
        %411 = vmatpush1.msra.mxu0 %v380
        %412 = vmatprep.subr.mxu0 0.0
        %413 = vmatpush1.msra.mxu0 %v381
        %414 = vmatprep.subr.mxu0 0.0
        %415 = vmatpush1.msra.mxu0 0.0
        %416 = vmatprep.subr.mxu0 0.0
        %417 = vmatpush1.msra.mxu0 0.0
        %418 = vmatprep.subr.mxu0 0.0
        %419 = vmatpush1.msra.mxu0 0.0
        %420 = vmatprep.subr.mxu0 0.0
        %421 = vmatpush1.msra.mxu0 0.0
        %422 = vmatprep.subr.mxu0 0.0
        %423 = vmatpush1.msra.mxu0 0.0
        %424 = vmatprep.subr.mxu0 0.0
        %425 = vmatpush1.msra.mxu0 0.0
        %426 = vmatprep.subr.mxu0 0.0
        %427 = vmatpush1.msra.mxu0 0.0
        %428 = vmatprep.subr.mxu0 0.0
        %429 = vmatpush1.msra.mxu0 0.0
        %430 = vmatprep.subr.mxu0 0.0
        %431 = vmatpush1.msra.mxu0 0.0
        %432 = vmatprep.subr.mxu0 0.0
        %433 = vmatpush1.msra.mxu0 0.0
        %434 = vmatprep.subr.mxu0 0.0
        %435 = vmatpush1.msra.mxu0 0.0
        %436 = vmatprep.subr.mxu0 0.0
        %437 = vmatpush1.msra.mxu0 0.0
        %438 = vmatprep.subr.mxu0 0.0
        %439 = vmatpush1.msra.mxu0 0.0
        %440 = vmatprep.subr.mxu0 0.0
        %441 = vmatpush1.msra.mxu0 0.0
        %442 = vmatprep.subr.mxu0 0.0
        %443 = vmatpush1.msra.mxu0 0.0
        %444 = vmatprep.subr.mxu0 0.0
        %445 = vmatpush1.msra.mxu0 0.0
        %446 = vmatprep.mubr.f32.mxu0 0.0
        %447 = vmatmul.mubr.f32.gmra.mrb[0].mxu0 %v334
        %v448 = vpop.f32.mrb[0].mxu0
        %v449 = vadd.f32 0.0, %v448
        %v450 = vpop.f32.mrb[0].mxu0
        %451 = vmatprep.mubr.f32.mxu0 0.0
        %452 = vmatmul.mubr.f32.gmra.mrb[0].mxu0 %v335
        %v453 = vpop.f32.mrb[0].mxu0
        %v454 = vadd.f32 0.0, %v453
        %v455 = vpop.f32.mrb[0].mxu0
        %456 = vmatprep.mubr.f32.mxu0 0.0
        %457 = vmatmul.mubr.f32.gmra.mrb[0].mxu0 %v336
        %v458 = vpop.f32.mrb[0].mxu0
        %v459 = vadd.f32 0.0, %v458
        %v460 = vpop.f32.mrb[0].mxu0
        %461 = vmatprep.mubr.f32.mxu0 0.0
        %462 = vmatmul.mubr.f32.gmra.mrb[0].mxu0 %v337
        %v463 = vpop.f32.mrb[0].mxu0
        %v464 = vadd.f32 0.0, %v463
        %v465 = vpop.f32.mrb[0].mxu0
        %466 = vmatprep.mubr.f32.mxu0 0.0
        %467 = vmatmul.mubr.f32.gmra.mrb[0].mxu0 %v338
        %v468 = vpop.f32.mrb[0].mxu0
        %v469 = vadd.f32 0.0, %v468
        %v470 = vpop.f32.mrb[0].mxu0
        %471 = vmatprep.mubr.f32.mxu0 0.0
        %472 = vmatmul.mubr.f32.gmra.mrb[0].mxu0 %v339
        %v473 = vpop.f32.mrb[0].mxu0
        %v474 = vadd.f32 0.0, %v473
        %v475 = vpop.f32.mrb[0].mxu0
        %476 = vmatprep.mubr.f32.mxu0 0.0
        %477 = vmatmul.mubr.f32.gmra.mrb[0].mxu0 %v340
        %v478 = vpop.f32.mrb[0].mxu0
        %v479 = vadd.f32 0.0, %v478
        %v480 = vpop.f32.mrb[0].mxu0
        %481 = vmatprep.mubr.f32.mxu0 0.0
        %482 = vmatmul.mubr.f32.gmra.mrb[0].mxu0 %v341
        %v483 = vpop.f32.mrb[0].mxu0
        %v484 = vadd.f32 0.0, %v483
        %v485 = vpop.f32.mrb[0].mxu0
        %486 = vmatprep.mubr.f32.mxu0 0.0
        %487 = vmatmul.mubr.f32.gmra.mrb[0].mxu0 %v342
        %v488 = vpop.f32.mrb[0].mxu0
        %v489 = vadd.f32 0.0, %v488
        %v490 = vpop.f32.mrb[0].mxu0
        %491 = vmatprep.mubr.f32.mxu0 0.0
        %492 = vmatmul.mubr.f32.gmra.mrb[0].mxu0 %v343
        %v493 = vpop.f32.mrb[0].mxu0
        %v494 = vadd.f32 0.0, %v493
        %v495 = vpop.f32.mrb[0].mxu0
        %496 = vmatprep.mubr.f32.mxu0 0.0
        %497 = vmatmul.mubr.f32.gmra.mrb[0].mxu0 %v344
        %v498 = vpop.f32.mrb[0].mxu0
        %v499 = vadd.f32 0.0, %v498
        %v500 = vpop.f32.mrb[0].mxu0
        %501 = vmatprep.mubr.f32.mxu0 0.0
        %502 = vmatmul.mubr.f32.gmra.mrb[0].mxu0 %v345
        %v503 = vpop.f32.mrb[0].mxu0
        %v504 = vadd.f32 0.0, %v503
        %v505 = vpop.f32.mrb[0].mxu0
        %506 = vmatprep.mubr.f32.mxu0 0.0
        %507 = vmatmul.mubr.f32.gmra.mrb[0].mxu0 %v346
        %v508 = vpop.f32.mrb[0].mxu0
        %v509 = vadd.f32 0.0, %v508
        %v510 = vpop.f32.mrb[0].mxu0
        %511 = vmatprep.mubr.f32.mxu0 0.0
        %512 = vmatmul.mubr.f32.gmra.mrb[0].mxu0 %v347
        %v513 = vpop.f32.mrb[0].mxu0
        %v514 = vadd.f32 0.0, %v513
        %v515 = vpop.f32.mrb[0].mxu0
        %516 = vmatprep.mubr.f32.mxu0 0.0
        %517 = vmatmul.mubr.f32.gmra.mrb[0].mxu0 %v348
        %v518 = vpop.f32.mrb[0].mxu0
        %v519 = vadd.f32 0.0, %v518
        %v520 = vpop.f32.mrb[0].mxu0
        %521 = vmatprep.mubr.f32.mxu0 0.0
        %522 = vmatmul.mubr.f32.gmra.mrb[0].mxu0 %v349
        %v523 = vpop.f32.mrb[0].mxu0
        %v524 = vadd.f32 0.0, %v523
        %v525 = vpop.f32.mrb[0].mxu0
        %526 = vmatprep.mubr.f32.mxu0 0.0
        %527 = vmatmul.mubr.f32.gmra.mrb[0].mxu0 %v350
        %v528 = vpop.f32.mrb[0].mxu0
        %v529 = vadd.f32 0.0, %v528
        %v530 = vpop.f32.mrb[0].mxu0
        %531 = vmatprep.mubr.f32.mxu0 0.0
        %532 = vmatmul.mubr.f32.gmra.mrb[0].mxu0 %v351
        %v533 = vpop.f32.mrb[0].mxu0
        %v534 = vadd.f32 0.0, %v533
        %v535 = vpop.f32.mrb[0].mxu0
        %536 = vmatprep.mubr.f32.mxu0 0.0
        %537 = vmatmul.mubr.f32.gmra.mrb[0].mxu0 %v352
        %v538 = vpop.f32.mrb[0].mxu0
        %v539 = vadd.f32 0.0, %v538
        %v540 = vpop.f32.mrb[0].mxu0
        %541 = vmatprep.mubr.f32.mxu0 0.0
        %542 = vmatmul.mubr.f32.gmra.mrb[0].mxu0 %v353
        %v543 = vpop.f32.mrb[0].mxu0
        %v544 = vadd.f32 0.0, %v543
        %v545 = vpop.f32.mrb[0].mxu0
        %546 = vmatprep.mubr.f32.mxu0 0.0
        %547 = vmatmul.mubr.f32.gmra.mrb[0].mxu0 %v354
        %v548 = vpop.f32.mrb[0].mxu0
        %v549 = vadd.f32 0.0, %v548
        %v550 = vpop.f32.mrb[0].mxu0
        %551 = vmatprep.mubr.f32.mxu0 0.0
        %552 = vmatmul.mubr.f32.gmra.mrb[0].mxu0 %v355
        %v553 = vpop.f32.mrb[0].mxu0
        %v554 = vadd.f32 0.0, %v553
        %v555 = vpop.f32.mrb[0].mxu0
        %556 = vmatprep.mubr.f32.mxu0 0.0
        %557 = vmatmul.mubr.f32.gmra.mrb[0].mxu0 %v356
        %v558 = vpop.f32.mrb[0].mxu0
        %v559 = vadd.f32 0.0, %v558
        %v560 = vpop.f32.mrb[0].mxu0
        %561 = vmatprep.mubr.f32.mxu0 0.0
        %562 = vmatmul.mubr.f32.gmra.mrb[0].mxu0 %v357
        %v563 = vpop.f32.mrb[0].mxu0
        %v564 = vadd.f32 0.0, %v563
        %v565 = vpop.f32.mrb[0].mxu0
        %566 = vmatprep.mubr.f32.mxu0 0.0
        %567 = vmatmul.mubr.f32.gmra.mrb[0].mxu0 %v358
        %v568 = vpop.f32.mrb[0].mxu0
        %v569 = vadd.f32 0.0, %v568
        %v570 = vpop.f32.mrb[0].mxu0
        %571 = vmatprep.mubr.f32.mxu0 0.0
        %572 = vmatmul.mubr.f32.gmra.mrb[0].mxu0 %v359
        %v573 = vpop.f32.mrb[0].mxu0
        %v574 = vadd.f32 0.0, %v573
        %v575 = vpop.f32.mrb[0].mxu0
        %576 = vmatprep.mubr.f32.mxu0 0.0
        %577 = vmatmul.mubr.f32.gmra.mrb[0].mxu0 %v360
        %v578 = vpop.f32.mrb[0].mxu0
        %v579 = vadd.f32 0.0, %v578
        %v580 = vpop.f32.mrb[0].mxu0
        %581 = vmatprep.mubr.f32.mxu0 0.0
        %582 = vmatmul.mubr.f32.gmra.mrb[0].mxu0 %v361
        %v583 = vpop.f32.mrb[0].mxu0
        %v584 = vadd.f32 0.0, %v583
        %v585 = vpop.f32.mrb[0].mxu0
        %586 = vmatprep.mubr.f32.mxu0 0.0
        %587 = vmatmul.mubr.f32.gmra.mrb[0].mxu0 %v362
        %v588 = vpop.f32.mrb[0].mxu0
        %v589 = vadd.f32 0.0, %v588
        %v590 = vpop.f32.mrb[0].mxu0
        %591 = vmatprep.mubr.f32.mxu0 0.0
        %592 = vmatmul.mubr.f32.gmra.mrb[0].mxu0 %v363
        %v593 = vpop.f32.mrb[0].mxu0
        %v594 = vadd.f32 0.0, %v593
        %v595 = vpop.f32.mrb[0].mxu0
        %596 = vmatprep.mubr.f32.mxu0 0.0
        %597 = vmatmul.mubr.f32.gmra.mrb[0].mxu0 %v364
        %v598 = vpop.f32.mrb[0].mxu0
        %v599 = vadd.f32 0.0, %v598
        %v600 = vpop.f32.mrb[0].mxu0
        %601 = vmatprep.mubr.f32.mxu0 0.0
        %602 = vmatmul.mubr.f32.gmra.mrb[0].mxu0 %v365
        %v603 = vpop.f32.mrb[0].mxu0
        %v604 = vadd.f32 0.0, %v603
        %v605 = vpop.f32.mrb[0].mxu0
        %606 = vdwg.mxu0
        %v607 = vmul.f32 %v449, %v334
        %v608 = vmul.f32 %v454, %v335
        %v609 = vmul.f32 %v459, %v336
        %v610 = vmul.f32 %v464, %v337
        %v611 = vmul.f32 %v469, %v338
        %v612 = vmul.f32 %v474, %v339
        %v613 = vmul.f32 %v479, %v340
        %v614 = vmul.f32 %v484, %v341
        %v615 = vmul.f32 %v489, %v342
        %v616 = vmul.f32 %v494, %v343
        %v617 = vmul.f32 %v499, %v344
        %v618 = vmul.f32 %v504, %v345
        %v619 = vmul.f32 %v509, %v346
        %v620 = vmul.f32 %v514, %v347
        %v621 = vmul.f32 %v519, %v348
        %v622 = vmul.f32 %v524, %v349
        %v623 = vmul.f32 %v529, %v350
        %v624 = vmul.f32 %v534, %v351
        %v625 = vmul.f32 %v539, %v352
        %v626 = vmul.f32 %v544, %v353
        %v627 = vmul.f32 %v549, %v354
        %v628 = vmul.f32 %v554, %v355
        %v629 = vmul.f32 %v559, %v356
        %v630 = vmul.f32 %v564, %v357
        %v631 = vmul.f32 %v569, %v358
        %v632 = vmul.f32 %v574, %v359
        %v633 = vmul.f32 %v579, %v360
        %v634 = vmul.f32 %v584, %v361
        %v635 = vmul.f32 %v589, %v362
        %v636 = vmul.f32 %v594, %v363
        %v637 = vmul.f32 %v599, %v364
        %v638 = vmul.f32 %v604, %v365
        %639 = vadd.xlane.f32.xlu0 %v607
        %v640 = vpop.xlane.xlu0 %639
        %641 = vadd.xlane.f32.xlu0 %v608
        %v642 = vpop.xlane.xlu0 %641
        %643 = vadd.xlane.f32.xlu0 %v609
        %v644 = vpop.xlane.xlu0 %643
        %645 = vadd.xlane.f32.xlu0 %v610
        %v646 = vpop.xlane.xlu0 %645
        %647 = vadd.xlane.f32.xlu0 %v611
        %v648 = vpop.xlane.xlu0 %647
        %649 = vadd.xlane.f32.xlu0 %v612
        %v650 = vpop.xlane.xlu0 %649
        %651 = vadd.xlane.f32.xlu0 %v613
        %v652 = vpop.xlane.xlu0 %651
        %653 = vadd.xlane.f32.xlu0 %v614
        %v654 = vpop.xlane.xlu0 %653
        %655 = vadd.xlane.f32.xlu0 %v615
        %v656 = vpop.xlane.xlu0 %655
        %657 = vadd.xlane.f32.xlu0 %v616
        %v658 = vpop.xlane.xlu0 %657
        %659 = vadd.xlane.f32.xlu0 %v617
        %v660 = vpop.xlane.xlu0 %659
        %661 = vadd.xlane.f32.xlu0 %v618
        %v662 = vpop.xlane.xlu0 %661
        %663 = vadd.xlane.f32.xlu0 %v619
        %v664 = vpop.xlane.xlu0 %663
        %665 = vadd.xlane.f32.xlu0 %v620
        %v666 = vpop.xlane.xlu0 %665
        %667 = vadd.xlane.f32.xlu0 %v621
        %v668 = vpop.xlane.xlu0 %667
        %669 = vadd.xlane.f32.xlu0 %v622
        %v670 = vpop.xlane.xlu0 %669
        %671 = vadd.xlane.f32.xlu0 %v623
        %v672 = vpop.xlane.xlu0 %671
        %673 = vadd.xlane.f32.xlu0 %v624
        %v674 = vpop.xlane.xlu0 %673
        %675 = vadd.xlane.f32.xlu0 %v625
        %v676 = vpop.xlane.xlu0 %675
        %677 = vadd.xlane.f32.xlu0 %v626
        %v678 = vpop.xlane.xlu0 %677
        %679 = vadd.xlane.f32.xlu0 %v627
        %v680 = vpop.xlane.xlu0 %679
        %681 = vadd.xlane.f32.xlu0 %v628
        %v682 = vpop.xlane.xlu0 %681
        %683 = vadd.xlane.f32.xlu0 %v629
        %v684 = vpop.xlane.xlu0 %683
        %685 = vadd.xlane.f32.xlu0 %v630
        %v686 = vpop.xlane.xlu0 %685
        %687 = vadd.xlane.f32.xlu0 %v631
        %v688 = vpop.xlane.xlu0 %687
        %689 = vadd.xlane.f32.xlu0 %v632
        %v690 = vpop.xlane.xlu0 %689
        %691 = vadd.xlane.f32.xlu0 %v633
        %v692 = vpop.xlane.xlu0 %691
        %693 = vadd.xlane.f32.xlu0 %v634
        %v694 = vpop.xlane.xlu0 %693
        %695 = vadd.xlane.f32.xlu0 %v635
        %v696 = vpop.xlane.xlu0 %695
        %697 = vadd.xlane.f32.xlu0 %v636
        %v698 = vpop.xlane.xlu0 %697
        %699 = vadd.xlane.f32.xlu0 %v637
        %v700 = vpop.xlane.xlu0 %699
        %701 = vadd.xlane.f32.xlu0 %v638
        %v702 = vpop.xlane.xlu0 %701
        %703 = vxpose.xlu0.b32.start [1/16] %v640, 128
        %704 = vxpose.xlu0.b32.cont [2/16] %v642, 128
        %705 = vxpose.xlu0.b32.cont [3/16] %v644, 128
        %706 = vxpose.xlu0.b32.cont [4/16] %v646, 128
        %707 = vxpose.xlu0.b32.cont [5/16] %v648, 128
        %708 = vxpose.xlu0.b32.cont [6/16] %v650, 128
        %709 = vxpose.xlu0.b32.cont [7/16] %v652, 128
        %710 = vxpose.xlu0.b32.cont [8/16] %v654, 128
        %711 = vxpose.xlu0.b32.cont [9/16] %v656, 128
        %712 = vxpose.xlu0.b32.cont [10/16] %v658, 128
        %713 = vxpose.xlu0.b32.cont [11/16] %v660, 128
        %714 = vxpose.xlu0.b32.cont [12/16] %v662, 128
        %715 = vxpose.xlu0.b32.cont [13/16] %v664, 128
        %716 = vxpose.xlu0.b32.cont [14/16] %v666, 128
        %717 = vxpose.xlu0.b32.cont [15/16] %v668, 128
        %718 = vxpose.xlu0.b32.end [16/16] %v670, 128
        %v719 = vpop.trf.xlu0
        %v720 = vpop.trf.xlu0
        %v721 = vpop.trf.xlu0
        %v722 = vpop.trf.xlu0
        %v723 = vpop.trf.xlu0
        %v724 = vpop.trf.xlu0
        %v725 = vpop.trf.xlu0
        %v726 = vpop.trf.xlu0
        %v727 = vpop.trf.xlu0
        %v728 = vpop.trf.xlu0
        %v729 = vpop.trf.xlu0
        %v730 = vpop.trf.xlu0
        %v731 = vpop.trf.xlu0
        %v732 = vpop.trf.xlu0
        %v733 = vpop.trf.xlu0
        %v734 = vpop.trf.xlu0
        %735 = vxpose.xlu0.b32.start [1/16] %v672, 128
        %736 = vxpose.xlu0.b32.cont [2/16] %v674, 128
        %737 = vxpose.xlu0.b32.cont [3/16] %v676, 128
        %738 = vxpose.xlu0.b32.cont [4/16] %v678, 128
        %739 = vxpose.xlu0.b32.cont [5/16] %v680, 128
        %740 = vxpose.xlu0.b32.cont [6/16] %v682, 128
        %741 = vxpose.xlu0.b32.cont [7/16] %v684, 128
        %742 = vxpose.xlu0.b32.cont [8/16] %v686, 128
        %743 = vxpose.xlu0.b32.cont [9/16] %v688, 128
        %744 = vxpose.xlu0.b32.cont [10/16] %v690, 128
        %745 = vxpose.xlu0.b32.cont [11/16] %v692, 128
        %746 = vxpose.xlu0.b32.cont [12/16] %v694, 128
        %747 = vxpose.xlu0.b32.cont [13/16] %v696, 128
        %748 = vxpose.xlu0.b32.cont [14/16] %v698, 128
        %749 = vxpose.xlu0.b32.cont [15/16] %v700, 128
        %750 = vxpose.xlu0.b32.end [16/16] %v702, 128
        %v751 = vpop.trf.xlu0
        %v752 = vpop.trf.xlu0
        %v753 = vpop.trf.xlu0
        %v754 = vpop.trf.xlu0
        %v755 = vpop.trf.xlu0
        %v756 = vpop.trf.xlu0
        %v757 = vpop.trf.xlu0
        %v758 = vpop.trf.xlu0
        %v759 = vpop.trf.xlu0
        %v760 = vpop.trf.xlu0
        %v761 = vpop.trf.xlu0
        %v762 = vpop.trf.xlu0
        %v763 = vpop.trf.xlu0
        %v764 = vpop.trf.xlu0
        %v765 = vpop.trf.xlu0
        %v766 = vpop.trf.xlu0
        %v769 = vcombine.low %v719, %v751
        %v771 = vunpack.c.l.s4 1966171168
        %v772 = vunpack.c.0.s8 %v771
        %v773 = vlaneseq
        %v774 = vshrl.u32 %v773, 7
        %v775 = vsub.s32 %v772, %v774
        %v776 = vrot.slane %v769, %v775
        %v778 = vunpack.c.l.s4 1966171168
        %v779 = vunpack.c.0.s8 %v778
        %v780 = vlaneseq
        %v781 = vshrl.u32 %v780, 7
        %v782 = vsub.s32 %v779, %v781
        %v783 = vrot.slane %v776, %v782
        %v785 = vlaneseq
        %vm786 = vcmp.ge.s32.totalorder %v785, 0
        %vm787 = vcmp.lt.s32.totalorder %v785, 256
        %vm788 = vmand %vm786, %vm787
        %789 = vst.msk [vmem:[%s254] sm:$0x3] %vm788, %v783
        %s790 = sand.u32 %s104, 1
        %s791 = scalar_lea.sflag [#allocation4], %s790
        %s792 = sand.u32 %s104, 1
        %s793 = smul.addr %s792, 2
        %s794 = scalar_lea.vmem [#allocation8], %s793
        // Predicated region
        $region45: #{tpu_custom_call.1} parent=31 // pred_check
          %p795 = pneg %p114
        $region46: #{tpu_custom_call.1} parent=31 // pred_check_branch
          %797 = sbr.rel (%p795) target = $region48
        $region47: #{tpu_custom_call.1} parent=31 // pred_region
          %s798 = smul.u32 2, %s23
          %s799 = ssub.s32 3, %s798
          %p800 = scmp.lt.s32.totalorder %s799, 2
          %s801 = scalar_select %p800, %s799, 2
          %s802 = smul.u32 16, %s801
          %s804 = ssub.s32 32, %s802
          %805 = vsyncadd %s791, %s804
          %p806 = scmp.ne.s32.totalorder 0, %s802
          %s807 = smul.addr %s798, 16
          %s808 = scalar_lea.hbm %s3, %s807
          %s809 = sshll.u32 %s801, 4
          %s810 = sshll.u32 %s794, 4
          %s811 = int_to_ptr.vmem [resolvable:$true] %s810
          %813 = dma.vmem_to_hbm [thread:$0]  (%p806), %s811, %s809, %s808, %s791
        $region48: #{tpu_custom_call.1} parent=31 // pred_fallthru
          _
      $region32: #{tpu_custom_call.1} parent=5 // pred_fallthru
        _
      %p814 = scmp.le.s32.totalorder 2, %s18
      // Predicated region
      $region49: #{tpu_custom_call.1} parent=5 // pred_check
        %p815 = pneg %p814
      $region50: #{tpu_custom_call.1} parent=5 // pred_check_branch
        %817 = sbr.rel (%p815) target = $region52
      $region51: #{tpu_custom_call.1} parent=5 // pred_region
        %s818 = ssub.s32 %s18, 2
        // Predicated region
        $region53: #{tpu_custom_call.1} parent=51 // pred_check
          %p819 = pneg %p120
        $region54: #{tpu_custom_call.1} parent=51 // pred_check_branch
          %821 = sbr.rel (%p819) target = $region56
        $region55: #{tpu_custom_call.1} parent=51 // pred_region
          %s822 = sand.u32 %s105, 1
          %s823 = scalar_lea.sflag [#allocation4], %s822
          %s824 = sand.u32 %s105, 1
          %s825 = smul.addr %s824, 2
          %s826 = scalar_lea.vmem [#allocation8], %s825
          %827 = dma.done %s823, 32
        $region56: #{tpu_custom_call.1} parent=51 // pred_fallthru
          _
      $region52: #{tpu_custom_call.1} parent=5 // pred_fallthru
        _
    $region6: #{tpu_custom_call.1} parent=1 // loop_footer
      %s22 = sadd.s32 1, %s18
    $region7: #{tpu_custom_call.1} parent=1 // loop_footer_branch
      %17 = sbr.rel target = $region3
    $region8: #{tpu_custom_call.1} parent=1 // loop_exit
      _
    %828 = vsyncpa [#allocation3], 1
    %s829 = scalar_lea.sflag [#allocation3], 1
    %830 = vsyncpa %s829, 1
    %831 = vsyncpa [#allocation6], 1
    %s832 = scalar_lea.sflag [#allocation6], 1
    %833 = vsyncpa %s832, 1
    %834 = vsyncpa [#allocation4], 1
    %s835 = scalar_lea.sflag [#allocation4], 1
    %836 = vsyncpa %s835, 1

// kernel: tpu_custom_call.1
$region0: #{tpu_custom_call.1}
  #allocation0 [shape = 'u32[]', space=smem, size = 0x4, offset = 0x4, fixed_abs, tag = 'smem constant byte address 0x4 - core index']
  #allocation1 [shape = 'u32[144,128]{1,0:T(1,128)}', space=vmem, size = 0x12000, scoped, tag = 'internal scratch']
  %s0 = inlined_call_operand.hbm [shape: f32[300,128], index: 0, kind: input, shape index: {}]
  %s1 = inlined_call_operand.hbm [shape: f32[300,128], index: 1, kind: input, shape index: {}]
  %s2 = inlined_call_operand.hbm [shape: f32[128,128], index: 2, kind: input, shape index: {}]
  %s3 = inlined_call_operand.hbm [shape: f32[1,300], index: 3, kind: output, shape index: {}]
  %s4 = sld [smem:[#allocation0]]
  $region57: #{tpu_custom_call.1} parent=0
    _
  %s6 = ssub.s32 1, %s4
  %s7 = scalar_select 0, %s6, %s4
  $region1: #{tpu_custom_call.1} parent=0
    #allocation2 [shape = 'u8[262144]{0}', space=vmem, size = 0x40000, scoped, tag = 'input window, operand 0']
    #allocation3 [shape = 's32[2]{0}', space=sflag, size = 0x8, scoped, tag = 'scoped memory for tpu_custom_call.1']
    #allocation4 [shape = 's32[2]{0}', space=sflag, size = 0x8, scoped, tag = 'scoped memory for tpu_custom_call.1']
    #allocation5 [shape = 'u8[262144]{0}', space=vmem, size = 0x40000, scoped, tag = 'input window, operand 1']
    #allocation6 [shape = 's32[2]{0}', space=sflag, size = 0x8, scoped, tag = 'scoped memory for tpu_custom_call.1']
    #allocation7 [shape = 'u8[65536]{0}', space=vmem, size = 0x10000, scoped, tag = 'input window, operand 2, single buffered']
    #allocation8 [shape = 'u8[2048]{0}', space=vmem, size = 0x800, scoped, tag = 'output window, operand 0']
    %8 = vsyncpa [#allocation3], 0
    %s9 = scalar_lea.sflag [#allocation3], 1
    %10 = vsyncpa %s9, 0
    %11 = vsyncpa [#allocation6], 0
    %s12 = scalar_lea.sflag [#allocation6], 1
    %13 = vsyncpa %s12, 0
    %14 = vsyncpa [#allocation4], 0
    %s15 = scalar_lea.sflag [#allocation4], 1
    %16 = vsyncpa %s15, 0
    loop: start=0, step=1, limit=4
    $region2: #{tpu_custom_call.1} parent=1 // loop_pre_header
      _
    $region3: #{tpu_custom_call.1} parent=1 // loop_header
      %s18 = sphi 0, %s22
      %p19 = scmp.ge.s32.totalorder %s18, 4
      %s28 = sphi 0, %s30
      %s31 = sphi 0, %s28
      %s32 = sphi 0, %s31
      %s48 = sphi 0, %s32
      %s54 = sphi 0, %s56
      %s57 = sphi 0, %s54
      %s58 = sphi 0, %s57
      %s74 = sphi 0, %s58
      %s78 = sphi 0, %s78
      %s80 = sphi 0, %s78
      %s81 = sphi 0, %s80
      %s95 = sphi 0, %s81
      %s101 = sphi 0, %s103
      %s104 = sphi 0, %s101
      %s105 = sphi 0, %s104
      %s121 = sphi 0, %s105
    $region4: #{tpu_custom_call.1} parent=1 // loop_header_branch
      %21 = sbr.rel (%p19) target = $region8
    $region5: #{tpu_custom_call.1} parent=1 // loop_body
      %s23 = ssub.s32 %s18, 1
      %s24 = ssub.s32 %s18, 2
      %s25 = sadd.s32 %s18, 1
      %s26 = ssub.s32 %s18, %s25
      %p27 = scmp.eq.s32.totalorder %s26, 0
      %s29 = sadd.s32 %s28, 1
      %s30 = scalar_select %p27, %s28, %s29
      %p33 = pneg %p27
      %p34 = scmp.eq.s32.totalorder %s18, 1
      %p35 = por %p33, %p34
      %p36 = scmp.ne.s32.totalorder %s28, %s31
      %p37 = scmp.eq.s32.totalorder %s18, 0
      %p38 = por %p36, %p37
      %p39 = scmp.ne.s32.totalorder %s28, %s31
      %p40 = scmp.eq.s32.totalorder %s23, 1
      %p41 = por %p39, %p40
      %p42 = scmp.ne.s32.totalorder %s31, %s32
      %p43 = scmp.eq.s32.totalorder %s23, 0
      %p44 = por %p42, %p43
      %p45 = scmp.ne.s32.totalorder %s31, %s32
      %p46 = scmp.eq.s32.totalorder %s24, 1
      %p47 = por %p45, %p46
      %p49 = scmp.ne.s32.totalorder %s32, %s48
      %p50 = scmp.eq.s32.totalorder %s24, 0
      %p51 = por %p49, %p50
      %s52 = ssub.s32 %s18, %s25
      %p53 = scmp.eq.s32.totalorder %s52, 0
      %s55 = sadd.s32 %s54, 1
      %s56 = scalar_select %p53, %s54, %s55
      %p59 = pneg %p53
      %p60 = scmp.eq.s32.totalorder %s18, 1
      %p61 = por %p59, %p60
      %p62 = scmp.ne.s32.totalorder %s54, %s57
      %p63 = scmp.eq.s32.totalorder %s18, 0
      %p64 = por %p62, %p63
      %p65 = scmp.ne.s32.totalorder %s54, %s57
      %p66 = scmp.eq.s32.totalorder %s23, 1
      %p67 = por %p65, %p66
      %p68 = scmp.ne.s32.totalorder %s57, %s58
      %p69 = scmp.eq.s32.totalorder %s23, 0
      %p70 = por %p68, %p69
      %p71 = scmp.ne.s32.totalorder %s57, %s58
      %p72 = scmp.eq.s32.totalorder %s24, 1
      %p73 = por %p71, %p72
      %p75 = scmp.ne.s32.totalorder %s58, %s74
      %p76 = scmp.eq.s32.totalorder %s24, 0
      %p77 = por %p75, %p76
      %s79 = sadd.s32 %s78, 1
      %p82 = scmp.eq.s32.totalorder %s18, 1
      %p83 = scmp.ne.s32.totalorder %s78, %s80
      %p84 = scmp.eq.s32.totalorder %s18, 0
      %p85 = por %p83, %p84
      %p86 = scmp.ne.s32.totalorder %s78, %s80
      %p87 = scmp.eq.s32.totalorder %s23, 1
      %p88 = por %p86, %p87
      %p89 = scmp.ne.s32.totalorder %s80, %s81
      %p90 = scmp.eq.s32.totalorder %s23, 0
      %p91 = por %p89, %p90
      %p92 = scmp.ne.s32.totalorder %s80, %s81
      %p93 = scmp.eq.s32.totalorder %s24, 1
      %p94 = por %p92, %p93
      %p96 = scmp.ne.s32.totalorder %s81, %s95
      %p97 = scmp.eq.s32.totalorder %s24, 0
      %p98 = por %p96, %p97
      %s99 = ssub.s32 %s18, %s25
      %p100 = scmp.eq.s32.totalorder %s99, 0
      %s102 = sadd.s32 %s101, 1
      %s103 = scalar_select %p100, %s101, %s102
      %p106 = pneg %p100
      %p107 = scmp.eq.s32.totalorder %s18, 1
      %p108 = por %p106, %p107
      %p109 = scmp.ne.s32.totalorder %s101, %s104
      %p110 = scmp.eq.s32.totalorder %s18, 0
      %p111 = por %p109, %p110
      %p112 = scmp.ne.s32.totalorder %s101, %s104
      %p113 = scmp.eq.s32.totalorder %s23, 1
      %p114 = por %p112, %p113
      %p115 = scmp.ne.s32.totalorder %s104, %s105
      %p116 = scmp.eq.s32.totalorder %s23, 0
      %p117 = por %p115, %p116
      %p118 = scmp.ne.s32.totalorder %s104, %s105
      %p119 = scmp.eq.s32.totalorder %s24, 1
      %p120 = por %p118, %p119
      %p122 = scmp.ne.s32.totalorder %s105, %s121
      %p123 = scmp.eq.s32.totalorder %s24, 0
      %p124 = por %p122, %p123
      %p125 = scmp.le.s32.totalorder 1, %s18
      %p126 = scmp.lt.s32.totalorder %s18, 3
      %p127 = pnand %p125, %p126
      %p128 = pneg %p127
      // Predicated region
      $region9: #{tpu_custom_call.1} parent=5 // pred_check
        _
      $region10: #{tpu_custom_call.1} parent=5 // pred_check_branch
        %130 = sbr.rel (%p127) target = $region12
      $region11: #{tpu_custom_call.1} parent=5 // pred_region
        %s131 = ssub.s32 %s18, 1
        // Predicated region
        $region13: #{tpu_custom_call.1} parent=11 // pred_check
          %p132 = pneg %p91
        $region14: #{tpu_custom_call.1} parent=11 // pred_check_branch
          %134 = sbr.rel (%p132) target = $region16
        $region15: #{tpu_custom_call.1} parent=11 // pred_region
          %s136 = ssub.s32 2048, 2048
          %137 = vsyncadd [#allocation6], %s136
          %s138 = sshll.u32 [#allocation7], 4
          %s139 = int_to_ptr.vmem [resolvable:$true] %s138
          %144 = dma.hbm_to_vmem [thread:$0]  %s2, 2048, %s139, [#allocation6], 128, 128, 8
        $region16: #{tpu_custom_call.1} parent=11 // pred_fallthru
          _
      $region12: #{tpu_custom_call.1} parent=5 // pred_fallthru
        _
      %p145 = scmp.lt.s32.totalorder %s18, 2
      // Predicated region
      $region17: #{tpu_custom_call.1} parent=5 // pred_check
        %p146 = pneg %p145
      $region18: #{tpu_custom_call.1} parent=5 // pred_check_branch
        %148 = sbr.rel (%p146) target = $region20
      $region19: #{tpu_custom_call.1} parent=5 // pred_region
        // Predicated region
        $region21: #{tpu_custom_call.1} parent=19 // pred_check
          %p149 = pneg %p38
        $region22: #{tpu_custom_call.1} parent=19 // pred_check_branch
          %151 = sbr.rel (%p149) target = $region24
        $region23: #{tpu_custom_call.1} parent=19 // pred_region
          %s152 = sand.u32 %s28, 1
          %s153 = scalar_lea.sflag [#allocation3], %s152
          %s154 = sand.u32 %s28, 1
          %s155 = smul.addr %s154, 256
          %s156 = scalar_lea.vmem [#allocation2], %s155
          %s157 = smul.u32 32, %s18
          %s158 = ssub.s32 38, %s157
          %p159 = scmp.lt.s32.totalorder %s158, 32
          %s160 = scalar_select %p159, %s158, 32
          %s161 = smul.u32 128, %s160
          %s163 = ssub.s32 4096, %s161
          %164 = vsyncadd %s153, %s163
          %p165 = scmp.ne.s32.totalorder 0, %s161
          %s166 = smul.addr %s157, 128
          %s167 = scalar_lea.hbm %s0, %s166
          %s168 = smul.u32 8, %s160
          %s169 = sshll.u32 %s156, 4
          %s170 = int_to_ptr.vmem [resolvable:$true] %s169
          %s171 = sshll.u32 %s168, 4
          %175 = dma.hbm_to_vmem [thread:$0]  (%p165), %s167, %s171, %s170, %s153, 128, 128, 8
        $region24: #{tpu_custom_call.1} parent=19 // pred_fallthru
          _
        // Predicated region
        $region25: #{tpu_custom_call.1} parent=19 // pred_check
          %p176 = pneg %p64
        $region26: #{tpu_custom_call.1} parent=19 // pred_check_branch
          %178 = sbr.rel (%p176) target = $region28
        $region27: #{tpu_custom_call.1} parent=19 // pred_region
          %s179 = sand.u32 %s18, 1
          %s180 = scalar_lea.sflag [#allocation6], %s179
          %s181 = sand.u32 %s54, 1
          %s182 = smul.addr %s181, 256
          %s183 = scalar_lea.vmem [#allocation5], %s182
          %s184 = smul.u32 32, %s18
          %s185 = ssub.s32 38, %s184
          %p186 = scmp.lt.s32.totalorder %s185, 32
          %s187 = scalar_select %p186, %s185, 32
          %s188 = smul.u32 128, %s187
          %s190 = ssub.s32 4096, %s188
          %191 = vsyncadd %s180, %s190
          %p192 = scmp.ne.s32.totalorder 0, %s188
          %s193 = smul.addr %s184, 128
          %s194 = scalar_lea.hbm %s1, %s193
          %s195 = smul.u32 8, %s187
          %s196 = sshll.u32 %s183, 4
          %s197 = int_to_ptr.vmem [resolvable:$true] %s196
          %s198 = sshll.u32 %s195, 4
          %202 = dma.hbm_to_vmem [thread:$0]  (%p192), %s194, %s198, %s197, %s180, 128, 128, 8
        $region28: #{tpu_custom_call.1} parent=19 // pred_fallthru
          _
      $region20: #{tpu_custom_call.1} parent=5 // pred_fallthru
        _
      %p203 = scmp.le.s32.totalorder 1, %s18
      %p204 = scmp.lt.s32.totalorder %s18, 3
      %p205 = pnand %p203, %p204
      %p206 = pneg %p205
      // Predicated region
      $region29: #{tpu_custom_call.1} parent=5 // pred_check
        _
      $region30: #{tpu_custom_call.1} parent=5 // pred_check_branch
        %208 = sbr.rel (%p205) target = $region32
      $region31: #{tpu_custom_call.1} parent=5 // pred_region
        %s209 = ssub.s32 %s18, 1
        %s210 = sand.u32 %s31, 1
        %s211 = scalar_lea.sflag [#allocation3], %s210
        %s212 = sand.u32 %s31, 1
        %s213 = smul.addr %s212, 256
        %s214 = scalar_lea.vmem [#allocation2], %s213
        // Predicated region
        $region33: #{tpu_custom_call.1} parent=31 // pred_check
          %p215 = pneg %p44
        $region34: #{tpu_custom_call.1} parent=31 // pred_check_branch
          %217 = sbr.rel (%p215) target = $region36
        $region35: #{tpu_custom_call.1} parent=31 // pred_region
          %218 = dma.done %s211, 4096
        $region36: #{tpu_custom_call.1} parent=31 // pred_fallthru
          _
        %s219 = sand.u32 %s23, 1
        %s220 = scalar_lea.sflag [#allocation6], %s219
        %s221 = sand.u32 %s57, 1
        %s222 = smul.addr %s221, 256
        %s223 = scalar_lea.vmem [#allocation5], %s222
        // Predicated region
        $region37: #{tpu_custom_call.1} parent=31 // pred_check
          %p224 = pneg %p70
        $region38: #{tpu_custom_call.1} parent=31 // pred_check_branch
          %226 = sbr.rel (%p224) target = $region40
        $region39: #{tpu_custom_call.1} parent=31 // pred_region
          %227 = dma.done %s220, 4096
        $region40: #{tpu_custom_call.1} parent=31 // pred_fallthru
          _
        // Predicated region
        $region41: #{tpu_custom_call.1} parent=31 // pred_check
          %p228 = pneg %p91
        $region42: #{tpu_custom_call.1} parent=31 // pred_check_branch
          %230 = sbr.rel (%p228) target = $region44
        $region43: #{tpu_custom_call.1} parent=31 // pred_region
          %231 = dma.done [#allocation6], 2048
        $region44: #{tpu_custom_call.1} parent=31 // pred_fallthru
          _
        %s232 = sand.u32 %s31, 1
        %s233 = scalar_lea.sflag [#allocation3], %s232
        %s234 = sand.u32 %s31, 1
        %s235 = smul.addr %s234, 256
        %s236 = scalar_lea.vmem [#allocation2], %s235
        %p237 = pneg %p44
        %p238 = pneg %p41
        %s239 = sand.u32 %s23, 1
        %s240 = scalar_lea.sflag [#allocation6], %s239
        %s241 = sand.u32 %s57, 1
        %s242 = smul.addr %s241, 256
        %s243 = scalar_lea.vmem [#allocation5], %s242
        %p244 = pneg %p70
        %p245 = pneg %p67
        %p246 = pneg %p91
        %p247 = pneg %p88
        %p248 = pneg %p117
        %p249 = pneg %p114
        %s250 = sand.u32 %s104, 1
        %s251 = scalar_lea.sflag [#allocation4], %s250
        %s252 = sand.u32 %s104, 1
        %s253 = smul.addr %s252, 2
        %s254 = scalar_lea.vmem [#allocation8], %s253
        %s255 = smul.u32 32, %s23
        %s256 = ssub.s32 38, %s255
        %p257 = scmp.lt.s32.totalorder %s256, 32
        %s258 = scalar_select %p257, %s256, 32
        %s259 = smul.u32 128, %s258
        %s260 = smul.u32 32, %s23
        %s261 = ssub.s32 38, %s260
        %p262 = scmp.lt.s32.totalorder %s261, 32
        %s263 = scalar_select %p262, %s261, 32
        %s264 = smul.u32 128, %s263
        %s265 = smul.u32 2, %s23
        %s266 = ssub.s32 3, %s265
        %p267 = scmp.lt.s32.totalorder %s266, 2
        %s268 = scalar_select %p267, %s266, 2
        %s269 = smul.u32 16, %s268
        %v270 = vld [vmem:[%s214] sm:$0xff]
        %v271 = vld [vmem:[%s214 + $0x8] sm:$0xff]
        %v272 = vld [vmem:[%s214 + $0x10] sm:$0xff]
        %v273 = vld [vmem:[%s214 + $0x18] sm:$0xff]
        %v274 = vld [vmem:[%s214 + $0x20] sm:$0xff]
        %v275 = vld [vmem:[%s214 + $0x28] sm:$0xff]
        %v276 = vld [vmem:[%s214 + $0x30] sm:$0xff]
        %v277 = vld [vmem:[%s214 + $0x38] sm:$0xff]
        %v278 = vld [vmem:[%s214 + $0x40] sm:$0xff]
        %v279 = vld [vmem:[%s214 + $0x48] sm:$0xff]
        %v280 = vld [vmem:[%s214 + $0x50] sm:$0xff]
        %v281 = vld [vmem:[%s214 + $0x58] sm:$0xff]
        %v282 = vld [vmem:[%s214 + $0x60] sm:$0xff]
        %v283 = vld [vmem:[%s214 + $0x68] sm:$0xff]
        %v284 = vld [vmem:[%s214 + $0x70] sm:$0xff]
        %v285 = vld [vmem:[%s214 + $0x78] sm:$0xff]
        %v286 = vld [vmem:[%s214 + $0x80] sm:$0xff]
        %v287 = vld [vmem:[%s214 + $0x88] sm:$0xff]
        %v288 = vld [vmem:[%s214 + $0x90] sm:$0xff]
        %v289 = vld [vmem:[%s214 + $0x98] sm:$0xff]
        %v290 = vld [vmem:[%s214 + $0xa0] sm:$0xff]
        %v291 = vld [vmem:[%s214 + $0xa8] sm:$0xff]
        %v292 = vld [vmem:[%s214 + $0xb0] sm:$0xff]
        %v293 = vld [vmem:[%s214 + $0xb8] sm:$0xff]
        %v294 = vld [vmem:[%s214 + $0xc0] sm:$0xff]
        %v295 = vld [vmem:[%s214 + $0xc8] sm:$0xff]
        %v296 = vld [vmem:[%s214 + $0xd0] sm:$0xff]
        %v297 = vld [vmem:[%s214 + $0xd8] sm:$0xff]
        %v298 = vld [vmem:[%s214 + $0xe0] sm:$0xff]
        %v299 = vld [vmem:[%s214 + $0xe8] sm:$0xff]
        %v300 = vld [vmem:[%s214 + $0xf0] sm:$0xff]
        %v301 = vld [vmem:[%s214 + $0xf8] sm:$0xff]
        %v302 = vld [vmem:[%s223] sm:$0xff]
        %v303 = vld [vmem:[%s223 + $0x8] sm:$0xff]
        %v304 = vld [vmem:[%s223 + $0x10] sm:$0xff]
        %v305 = vld [vmem:[%s223 + $0x18] sm:$0xff]
        %v306 = vld [vmem:[%s223 + $0x20] sm:$0xff]
        %v307 = vld [vmem:[%s223 + $0x28] sm:$0xff]
        %v308 = vld [vmem:[%s223 + $0x30] sm:$0xff]
        %v309 = vld [vmem:[%s223 + $0x38] sm:$0xff]
        %v310 = vld [vmem:[%s223 + $0x40] sm:$0xff]
        %v311 = vld [vmem:[%s223 + $0x48] sm:$0xff]
        %v312 = vld [vmem:[%s223 + $0x50] sm:$0xff]
        %v313 = vld [vmem:[%s223 + $0x58] sm:$0xff]
        %v314 = vld [vmem:[%s223 + $0x60] sm:$0xff]
        %v315 = vld [vmem:[%s223 + $0x68] sm:$0xff]
        %v316 = vld [vmem:[%s223 + $0x70] sm:$0xff]
        %v317 = vld [vmem:[%s223 + $0x78] sm:$0xff]
        %v318 = vld [vmem:[%s223 + $0x80] sm:$0xff]
        %v319 = vld [vmem:[%s223 + $0x88] sm:$0xff]
        %v320 = vld [vmem:[%s223 + $0x90] sm:$0xff]
        %v321 = vld [vmem:[%s223 + $0x98] sm:$0xff]
        %v322 = vld [vmem:[%s223 + $0xa0] sm:$0xff]
        %v323 = vld [vmem:[%s223 + $0xa8] sm:$0xff]
        %v324 = vld [vmem:[%s223 + $0xb0] sm:$0xff]
        %v325 = vld [vmem:[%s223 + $0xb8] sm:$0xff]
        %v326 = vld [vmem:[%s223 + $0xc0] sm:$0xff]
        %v327 = vld [vmem:[%s223 + $0xc8] sm:$0xff]
        %v328 = vld [vmem:[%s223 + $0xd0] sm:$0xff]
        %v329 = vld [vmem:[%s223 + $0xd8] sm:$0xff]
        %v330 = vld [vmem:[%s223 + $0xe0] sm:$0xff]
        %v331 = vld [vmem:[%s223 + $0xe8] sm:$0xff]
        %v332 = vld [vmem:[%s223 + $0xf0] sm:$0xff]
        %v333 = vld [vmem:[%s223 + $0xf8] sm:$0xff]
        %v334 = vsub.f32 %v270, %v302
        %v335 = vsub.f32 %v271, %v303
        %v336 = vsub.f32 %v272, %v304
        %v337 = vsub.f32 %v273, %v305
        %v338 = vsub.f32 %v274, %v306
        %v339 = vsub.f32 %v275, %v307
        %v340 = vsub.f32 %v276, %v308
        %v341 = vsub.f32 %v277, %v309
        %v342 = vsub.f32 %v278, %v310
        %v343 = vsub.f32 %v279, %v311
        %v344 = vsub.f32 %v280, %v312
        %v345 = vsub.f32 %v281, %v313
        %v346 = vsub.f32 %v282, %v314
        %v347 = vsub.f32 %v283, %v315
        %v348 = vsub.f32 %v284, %v316
        %v349 = vsub.f32 %v285, %v317
        %v350 = vsub.f32 %v286, %v318
        %v351 = vsub.f32 %v287, %v319
        %v352 = vsub.f32 %v288, %v320
        %v353 = vsub.f32 %v289, %v321
        %v354 = vsub.f32 %v290, %v322
        %v355 = vsub.f32 %v291, %v323
        %v356 = vsub.f32 %v292, %v324
        %v357 = vsub.f32 %v293, %v325
        %v358 = vsub.f32 %v294, %v326
        %v359 = vsub.f32 %v295, %v327
        %v360 = vsub.f32 %v296, %v328
        %v361 = vsub.f32 %v297, %v329
        %v362 = vsub.f32 %v298, %v330
        %v363 = vsub.f32 %v299, %v331
        %v364 = vsub.f32 %v300, %v332
        %v365 = vsub.f32 %v301, %v333
        %v366 = vld [vmem:[#allocation7] sm:$0xff]
        %v367 = vld [vmem:[#allocation7 + $0x8] sm:$0xff]
        %v368 = vld [vmem:[#allocation7 + $0x10] sm:$0xff]
        %v369 = vld [vmem:[#allocation7 + $0x18] sm:$0xff]
        %v370 = vld [vmem:[#allocation7 + $0x20] sm:$0xff]
        %v371 = vld [vmem:[#allocation7 + $0x28] sm:$0xff]
        %v372 = vld [vmem:[#allocation7 + $0x30] sm:$0xff]
        %v373 = vld [vmem:[#allocation7 + $0x38] sm:$0xff]
        %v374 = vld [vmem:[#allocation7 + $0x40] sm:$0xff]
        %v375 = vld [vmem:[#allocation7 + $0x48] sm:$0xff]
        %v376 = vld [vmem:[#allocation7 + $0x50] sm:$0xff]
        %v377 = vld [vmem:[#allocation7 + $0x58] sm:$0xff]
        %v378 = vld [vmem:[#allocation7 + $0x60] sm:$0xff]
        %v379 = vld [vmem:[#allocation7 + $0x68] sm:$0xff]
        %v380 = vld [vmem:[#allocation7 + $0x70] sm:$0xff]
        %v381 = vld [vmem:[#allocation7 + $0x78] sm:$0xff]
        %382 = vmatprep.subr.mxu0 0.0
        %383 = vmatpush1.msra.mxu0 %v366
        %384 = vmatprep.subr.mxu0 0.0
        %385 = vmatpush1.msra.mxu0 %v367
        %386 = vmatprep.subr.mxu0 0.0
        %387 = vmatpush1.msra.mxu0 %v368
        %388 = vmatprep.subr.mxu0 0.0
        %389 = vmatpush1.msra.mxu0 %v369
        %390 = vmatprep.subr.mxu0 0.0
        %391 = vmatpush1.msra.mxu0 %v370
        %392 = vmatprep.subr.mxu0 0.0
        %393 = vmatpush1.msra.mxu0 %v371
        %394 = vmatprep.subr.mxu0 0.0
        %395 = vmatpush1.msra.mxu0 %v372
        %396 = vmatprep.subr.mxu0 0.0
        %397 = vmatpush1.msra.mxu0 %v373
        %398 = vmatprep.subr.mxu0 0.0
        %399 = vmatpush1.msra.mxu0 %v374
        %400 = vmatprep.subr.mxu0 0.0
        %401 = vmatpush1.msra.mxu0 %v375
        %402 = vmatprep.subr.mxu0 0.0
        %403 = vmatpush1.msra.mxu0 %v376
        %404 = vmatprep.subr.mxu0 0.0
        %405 = vmatpush1.msra.mxu0 %v377
        %406 = vmatprep.subr.mxu0 0.0
        %407 = vmatpush1.msra.mxu0 %v378
        %408 = vmatprep.subr.mxu0 0.0
        %409 = vmatpush1.msra.mxu0 %v379
        %410 = vmatprep.subr.mxu0 0.0
        %411 = vmatpush1.msra.mxu0 %v380
        %412 = vmatprep.subr.mxu0 0.0
        %413 = vmatpush1.msra.mxu0 %v381
        %414 = vmatprep.subr.mxu0 0.0
        %415 = vmatpush1.msra.mxu0 0.0
        %416 = vmatprep.subr.mxu0 0.0
        %417 = vmatpush1.msra.mxu0 0.0
        %418 = vmatprep.subr.mxu0 0.0
        %419 = vmatpush1.msra.mxu0 0.0
        %420 = vmatprep.subr.mxu0 0.0
        %421 = vmatpush1.msra.mxu0 0.0
        %422 = vmatprep.subr.mxu0 0.0
        %423 = vmatpush1.msra.mxu0 0.0
        %424 = vmatprep.subr.mxu0 0.0
        %425 = vmatpush1.msra.mxu0 0.0
        %426 = vmatprep.subr.mxu0 0.0
        %427 = vmatpush1.msra.mxu0 0.0
        %428 = vmatprep.subr.mxu0 0.0
        %429 = vmatpush1.msra.mxu0 0.0
        %430 = vmatprep.subr.mxu0 0.0
        %431 = vmatpush1.msra.mxu0 0.0
        %432 = vmatprep.subr.mxu0 0.0
        %433 = vmatpush1.msra.mxu0 0.0
        %434 = vmatprep.subr.mxu0 0.0
        %435 = vmatpush1.msra.mxu0 0.0
        %436 = vmatprep.subr.mxu0 0.0
        %437 = vmatpush1.msra.mxu0 0.0
        %438 = vmatprep.subr.mxu0 0.0
        %439 = vmatpush1.msra.mxu0 0.0
        %440 = vmatprep.subr.mxu0 0.0
        %441 = vmatpush1.msra.mxu0 0.0
        %442 = vmatprep.subr.mxu0 0.0
        %443 = vmatpush1.msra.mxu0 0.0
        %444 = vmatprep.subr.mxu0 0.0
        %445 = vmatpush1.msra.mxu0 0.0
        %446 = vmatprep.mubr.f32.mxu0 0.0
        %447 = vmatmul.mubr.f32.gmra.mrb[0].mxu0 %v334
        %v448 = vpop.f32.mrb[0].mxu0
        %v449 = vadd.f32 0.0, %v448
        %v450 = vpop.f32.mrb[0].mxu0
        %451 = vmatprep.mubr.f32.mxu0 0.0
        %452 = vmatmul.mubr.f32.gmra.mrb[0].mxu0 %v335
        %v453 = vpop.f32.mrb[0].mxu0
        %v454 = vadd.f32 0.0, %v453
        %v455 = vpop.f32.mrb[0].mxu0
        %456 = vmatprep.mubr.f32.mxu0 0.0
        %457 = vmatmul.mubr.f32.gmra.mrb[0].mxu0 %v336
        %v458 = vpop.f32.mrb[0].mxu0
        %v459 = vadd.f32 0.0, %v458
        %v460 = vpop.f32.mrb[0].mxu0
        %461 = vmatprep.mubr.f32.mxu0 0.0
        %462 = vmatmul.mubr.f32.gmra.mrb[0].mxu0 %v337
        %v463 = vpop.f32.mrb[0].mxu0
        %v464 = vadd.f32 0.0, %v463
        %v465 = vpop.f32.mrb[0].mxu0
        %466 = vmatprep.mubr.f32.mxu0 0.0
        %467 = vmatmul.mubr.f32.gmra.mrb[0].mxu0 %v338
        %v468 = vpop.f32.mrb[0].mxu0
        %v469 = vadd.f32 0.0, %v468
        %v470 = vpop.f32.mrb[0].mxu0
        %471 = vmatprep.mubr.f32.mxu0 0.0
        %472 = vmatmul.mubr.f32.gmra.mrb[0].mxu0 %v339
        %v473 = vpop.f32.mrb[0].mxu0
        %v474 = vadd.f32 0.0, %v473
        %v475 = vpop.f32.mrb[0].mxu0
        %476 = vmatprep.mubr.f32.mxu0 0.0
        %477 = vmatmul.mubr.f32.gmra.mrb[0].mxu0 %v340
        %v478 = vpop.f32.mrb[0].mxu0
        %v479 = vadd.f32 0.0, %v478
        %v480 = vpop.f32.mrb[0].mxu0
        %481 = vmatprep.mubr.f32.mxu0 0.0
        %482 = vmatmul.mubr.f32.gmra.mrb[0].mxu0 %v341
        %v483 = vpop.f32.mrb[0].mxu0
        %v484 = vadd.f32 0.0, %v483
        %v485 = vpop.f32.mrb[0].mxu0
        %486 = vmatprep.mubr.f32.mxu0 0.0
        %487 = vmatmul.mubr.f32.gmra.mrb[0].mxu0 %v342
        %v488 = vpop.f32.mrb[0].mxu0
        %v489 = vadd.f32 0.0, %v488
        %v490 = vpop.f32.mrb[0].mxu0
        %491 = vmatprep.mubr.f32.mxu0 0.0
        %492 = vmatmul.mubr.f32.gmra.mrb[0].mxu0 %v343
        %v493 = vpop.f32.mrb[0].mxu0
        %v494 = vadd.f32 0.0, %v493
        %v495 = vpop.f32.mrb[0].mxu0
        %496 = vmatprep.mubr.f32.mxu0 0.0
        %497 = vmatmul.mubr.f32.gmra.mrb[0].mxu0 %v344
        %v498 = vpop.f32.mrb[0].mxu0
        %v499 = vadd.f32 0.0, %v498
        %v500 = vpop.f32.mrb[0].mxu0
        %501 = vmatprep.mubr.f32.mxu0 0.0
        %502 = vmatmul.mubr.f32.gmra.mrb[0].mxu0 %v345
        %v503 = vpop.f32.mrb[0].mxu0
        %v504 = vadd.f32 0.0, %v503
        %v505 = vpop.f32.mrb[0].mxu0
        %506 = vmatprep.mubr.f32.mxu0 0.0
        %507 = vmatmul.mubr.f32.gmra.mrb[0].mxu0 %v346
        %v508 = vpop.f32.mrb[0].mxu0
        %v509 = vadd.f32 0.0, %v508
        %v510 = vpop.f32.mrb[0].mxu0
        %511 = vmatprep.mubr.f32.mxu0 0.0
        %512 = vmatmul.mubr.f32.gmra.mrb[0].mxu0 %v347
        %v513 = vpop.f32.mrb[0].mxu0
        %v514 = vadd.f32 0.0, %v513
        %v515 = vpop.f32.mrb[0].mxu0
        %516 = vmatprep.mubr.f32.mxu0 0.0
        %517 = vmatmul.mubr.f32.gmra.mrb[0].mxu0 %v348
        %v518 = vpop.f32.mrb[0].mxu0
        %v519 = vadd.f32 0.0, %v518
        %v520 = vpop.f32.mrb[0].mxu0
        %521 = vmatprep.mubr.f32.mxu0 0.0
        %522 = vmatmul.mubr.f32.gmra.mrb[0].mxu0 %v349
        %v523 = vpop.f32.mrb[0].mxu0
        %v524 = vadd.f32 0.0, %v523
        %v525 = vpop.f32.mrb[0].mxu0
        %526 = vmatprep.mubr.f32.mxu0 0.0
        %527 = vmatmul.mubr.f32.gmra.mrb[0].mxu0 %v350
        %v528 = vpop.f32.mrb[0].mxu0
        %v529 = vadd.f32 0.0, %v528
        %v530 = vpop.f32.mrb[0].mxu0
        %531 = vmatprep.mubr.f32.mxu0 0.0
        %532 = vmatmul.mubr.f32.gmra.mrb[0].mxu0 %v351
        %v533 = vpop.f32.mrb[0].mxu0
        %v534 = vadd.f32 0.0, %v533
        %v535 = vpop.f32.mrb[0].mxu0
        %536 = vmatprep.mubr.f32.mxu0 0.0
        %537 = vmatmul.mubr.f32.gmra.mrb[0].mxu0 %v352
        %v538 = vpop.f32.mrb[0].mxu0
        %v539 = vadd.f32 0.0, %v538
        %v540 = vpop.f32.mrb[0].mxu0
        %541 = vmatprep.mubr.f32.mxu0 0.0
        %542 = vmatmul.mubr.f32.gmra.mrb[0].mxu0 %v353
        %v543 = vpop.f32.mrb[0].mxu0
        %v544 = vadd.f32 0.0, %v543
        %v545 = vpop.f32.mrb[0].mxu0
        %546 = vmatprep.mubr.f32.mxu0 0.0
        %547 = vmatmul.mubr.f32.gmra.mrb[0].mxu0 %v354
        %v548 = vpop.f32.mrb[0].mxu0
        %v549 = vadd.f32 0.0, %v548
        %v550 = vpop.f32.mrb[0].mxu0
        %551 = vmatprep.mubr.f32.mxu0 0.0
        %552 = vmatmul.mubr.f32.gmra.mrb[0].mxu0 %v355
        %v553 = vpop.f32.mrb[0].mxu0
        %v554 = vadd.f32 0.0, %v553
        %v555 = vpop.f32.mrb[0].mxu0
        %556 = vmatprep.mubr.f32.mxu0 0.0
        %557 = vmatmul.mubr.f32.gmra.mrb[0].mxu0 %v356
        %v558 = vpop.f32.mrb[0].mxu0
        %v559 = vadd.f32 0.0, %v558
        %v560 = vpop.f32.mrb[0].mxu0
        %561 = vmatprep.mubr.f32.mxu0 0.0
        %562 = vmatmul.mubr.f32.gmra.mrb[0].mxu0 %v357
        %v563 = vpop.f32.mrb[0].mxu0
        %v564 = vadd.f32 0.0, %v563
        %v565 = vpop.f32.mrb[0].mxu0
        %566 = vmatprep.mubr.f32.mxu0 0.0
        %567 = vmatmul.mubr.f32.gmra.mrb[0].mxu0 %v358
        %v568 = vpop.f32.mrb[0].mxu0
        %v569 = vadd.f32 0.0, %v568
        %v570 = vpop.f32.mrb[0].mxu0
        %571 = vmatprep.mubr.f32.mxu0 0.0
        %572 = vmatmul.mubr.f32.gmra.mrb[0].mxu0 %v359
        %v573 = vpop.f32.mrb[0].mxu0
        %v574 = vadd.f32 0.0, %v573
        %v575 = vpop.f32.mrb[0].mxu0
        %576 = vmatprep.mubr.f32.mxu0 0.0
        %577 = vmatmul.mubr.f32.gmra.mrb[0].mxu0 %v360
        %v578 = vpop.f32.mrb[0].mxu0
        %v579 = vadd.f32 0.0, %v578
        %v580 = vpop.f32.mrb[0].mxu0
        %581 = vmatprep.mubr.f32.mxu0 0.0
        %582 = vmatmul.mubr.f32.gmra.mrb[0].mxu0 %v361
        %v583 = vpop.f32.mrb[0].mxu0
        %v584 = vadd.f32 0.0, %v583
        %v585 = vpop.f32.mrb[0].mxu0
        %586 = vmatprep.mubr.f32.mxu0 0.0
        %587 = vmatmul.mubr.f32.gmra.mrb[0].mxu0 %v362
        %v588 = vpop.f32.mrb[0].mxu0
        %v589 = vadd.f32 0.0, %v588
        %v590 = vpop.f32.mrb[0].mxu0
        %591 = vmatprep.mubr.f32.mxu0 0.0
        %592 = vmatmul.mubr.f32.gmra.mrb[0].mxu0 %v363
        %v593 = vpop.f32.mrb[0].mxu0
        %v594 = vadd.f32 0.0, %v593
        %v595 = vpop.f32.mrb[0].mxu0
        %596 = vmatprep.mubr.f32.mxu0 0.0
        %597 = vmatmul.mubr.f32.gmra.mrb[0].mxu0 %v364
        %v598 = vpop.f32.mrb[0].mxu0
        %v599 = vadd.f32 0.0, %v598
        %v600 = vpop.f32.mrb[0].mxu0
        %601 = vmatprep.mubr.f32.mxu0 0.0
        %602 = vmatmul.mubr.f32.gmra.mrb[0].mxu0 %v365
        %v603 = vpop.f32.mrb[0].mxu0
        %v604 = vadd.f32 0.0, %v603
        %v605 = vpop.f32.mrb[0].mxu0
        %606 = vdwg.mxu0
        %v607 = vmul.f32 %v449, %v334
        %v608 = vmul.f32 %v454, %v335
        %v609 = vmul.f32 %v459, %v336
        %v610 = vmul.f32 %v464, %v337
        %v611 = vmul.f32 %v469, %v338
        %v612 = vmul.f32 %v474, %v339
        %v613 = vmul.f32 %v479, %v340
        %v614 = vmul.f32 %v484, %v341
        %v615 = vmul.f32 %v489, %v342
        %v616 = vmul.f32 %v494, %v343
        %v617 = vmul.f32 %v499, %v344
        %v618 = vmul.f32 %v504, %v345
        %v619 = vmul.f32 %v509, %v346
        %v620 = vmul.f32 %v514, %v347
        %v621 = vmul.f32 %v519, %v348
        %v622 = vmul.f32 %v524, %v349
        %v623 = vmul.f32 %v529, %v350
        %v624 = vmul.f32 %v534, %v351
        %v625 = vmul.f32 %v539, %v352
        %v626 = vmul.f32 %v544, %v353
        %v627 = vmul.f32 %v549, %v354
        %v628 = vmul.f32 %v554, %v355
        %v629 = vmul.f32 %v559, %v356
        %v630 = vmul.f32 %v564, %v357
        %v631 = vmul.f32 %v569, %v358
        %v632 = vmul.f32 %v574, %v359
        %v633 = vmul.f32 %v579, %v360
        %v634 = vmul.f32 %v584, %v361
        %v635 = vmul.f32 %v589, %v362
        %v636 = vmul.f32 %v594, %v363
        %v637 = vmul.f32 %v599, %v364
        %v638 = vmul.f32 %v604, %v365
        %639 = vadd.xlane.f32.xlu0 %v607
        %v640 = vpop.xlane.xlu0 %639
        %641 = vadd.xlane.f32.xlu0 %v608
        %v642 = vpop.xlane.xlu0 %641
        %643 = vadd.xlane.f32.xlu0 %v609
        %v644 = vpop.xlane.xlu0 %643
        %645 = vadd.xlane.f32.xlu0 %v610
        %v646 = vpop.xlane.xlu0 %645
        %647 = vadd.xlane.f32.xlu0 %v611
        %v648 = vpop.xlane.xlu0 %647
        %649 = vadd.xlane.f32.xlu0 %v612
        %v650 = vpop.xlane.xlu0 %649
        %651 = vadd.xlane.f32.xlu0 %v613
        %v652 = vpop.xlane.xlu0 %651
        %653 = vadd.xlane.f32.xlu0 %v614
        %v654 = vpop.xlane.xlu0 %653
        %655 = vadd.xlane.f32.xlu0 %v615
        %v656 = vpop.xlane.xlu0 %655
        %657 = vadd.xlane.f32.xlu0 %v616
        %v658 = vpop.xlane.xlu0 %657
        %659 = vadd.xlane.f32.xlu0 %v617
        %v660 = vpop.xlane.xlu0 %659
        %661 = vadd.xlane.f32.xlu0 %v618
        %v662 = vpop.xlane.xlu0 %661
        %663 = vadd.xlane.f32.xlu0 %v619
        %v664 = vpop.xlane.xlu0 %663
        %665 = vadd.xlane.f32.xlu0 %v620
        %v666 = vpop.xlane.xlu0 %665
        %667 = vadd.xlane.f32.xlu0 %v621
        %v668 = vpop.xlane.xlu0 %667
        %669 = vadd.xlane.f32.xlu0 %v622
        %v670 = vpop.xlane.xlu0 %669
        %671 = vadd.xlane.f32.xlu0 %v623
        %v672 = vpop.xlane.xlu0 %671
        %673 = vadd.xlane.f32.xlu0 %v624
        %v674 = vpop.xlane.xlu0 %673
        %675 = vadd.xlane.f32.xlu0 %v625
        %v676 = vpop.xlane.xlu0 %675
        %677 = vadd.xlane.f32.xlu0 %v626
        %v678 = vpop.xlane.xlu0 %677
        %679 = vadd.xlane.f32.xlu0 %v627
        %v680 = vpop.xlane.xlu0 %679
        %681 = vadd.xlane.f32.xlu0 %v628
        %v682 = vpop.xlane.xlu0 %681
        %683 = vadd.xlane.f32.xlu0 %v629
        %v684 = vpop.xlane.xlu0 %683
        %685 = vadd.xlane.f32.xlu0 %v630
        %v686 = vpop.xlane.xlu0 %685
        %687 = vadd.xlane.f32.xlu0 %v631
        %v688 = vpop.xlane.xlu0 %687
        %689 = vadd.xlane.f32.xlu0 %v632
        %v690 = vpop.xlane.xlu0 %689
        %691 = vadd.xlane.f32.xlu0 %v633
        %v692 = vpop.xlane.xlu0 %691
        %693 = vadd.xlane.f32.xlu0 %v634
        %v694 = vpop.xlane.xlu0 %693
        %695 = vadd.xlane.f32.xlu0 %v635
        %v696 = vpop.xlane.xlu0 %695
        %697 = vadd.xlane.f32.xlu0 %v636
        %v698 = vpop.xlane.xlu0 %697
        %699 = vadd.xlane.f32.xlu0 %v637
        %v700 = vpop.xlane.xlu0 %699
        %701 = vadd.xlane.f32.xlu0 %v638
        %v702 = vpop.xlane.xlu0 %701
        %703 = vxpose.xlu0.b32.start [1/16] %v640, 128
        %704 = vxpose.xlu0.b32.cont [2/16] %v642, 128
        %705 = vxpose.xlu0.b32.cont [3/16] %v644, 128
        %706 = vxpose.xlu0.b32.cont [4/16] %v646, 128
        %707 = vxpose.xlu0.b32.cont [5/16] %v648, 128
        %708 = vxpose.xlu0.b32.cont [6/16] %v650, 128
        %709 = vxpose.xlu0.b32.cont [7/16] %v652, 128
        %710 = vxpose.xlu0.b32.cont [8/16] %v654, 128
        %711 = vxpose.xlu0.b32.cont [9/16] %v656, 128
        %712 = vxpose.xlu0.b32.cont [10/16] %v658, 128
        %713 = vxpose.xlu0.b32.cont [11/16] %v660, 128
        %714 = vxpose.xlu0.b32.cont [12/16] %v662, 128
        %715 = vxpose.xlu0.b32.cont [13/16] %v664, 128
        %716 = vxpose.xlu0.b32.cont [14/16] %v666, 128
        %717 = vxpose.xlu0.b32.cont [15/16] %v668, 128
        %718 = vxpose.xlu0.b32.end [16/16] %v670, 128
        %v719 = vpop.trf.xlu0
        %v720 = vpop.trf.xlu0
        %v721 = vpop.trf.xlu0
        %v722 = vpop.trf.xlu0
        %v723 = vpop.trf.xlu0
        %v724 = vpop.trf.xlu0
        %v725 = vpop.trf.xlu0
        %v726 = vpop.trf.xlu0
        %v727 = vpop.trf.xlu0
        %v728 = vpop.trf.xlu0
        %v729 = vpop.trf.xlu0
        %v730 = vpop.trf.xlu0
        %v731 = vpop.trf.xlu0
        %v732 = vpop.trf.xlu0
        %v733 = vpop.trf.xlu0
        %v734 = vpop.trf.xlu0
        %735 = vxpose.xlu0.b32.start [1/16] %v672, 128
        %736 = vxpose.xlu0.b32.cont [2/16] %v674, 128
        %737 = vxpose.xlu0.b32.cont [3/16] %v676, 128
        %738 = vxpose.xlu0.b32.cont [4/16] %v678, 128
        %739 = vxpose.xlu0.b32.cont [5/16] %v680, 128
        %740 = vxpose.xlu0.b32.cont [6/16] %v682, 128
        %741 = vxpose.xlu0.b32.cont [7/16] %v684, 128
        %742 = vxpose.xlu0.b32.cont [8/16] %v686, 128
        %743 = vxpose.xlu0.b32.cont [9/16] %v688, 128
        %744 = vxpose.xlu0.b32.cont [10/16] %v690, 128
        %745 = vxpose.xlu0.b32.cont [11/16] %v692, 128
        %746 = vxpose.xlu0.b32.cont [12/16] %v694, 128
        %747 = vxpose.xlu0.b32.cont [13/16] %v696, 128
        %748 = vxpose.xlu0.b32.cont [14/16] %v698, 128
        %749 = vxpose.xlu0.b32.cont [15/16] %v700, 128
        %750 = vxpose.xlu0.b32.end [16/16] %v702, 128
        %v751 = vpop.trf.xlu0
        %v752 = vpop.trf.xlu0
        %v753 = vpop.trf.xlu0
        %v754 = vpop.trf.xlu0
        %v755 = vpop.trf.xlu0
        %v756 = vpop.trf.xlu0
        %v757 = vpop.trf.xlu0
        %v758 = vpop.trf.xlu0
        %v759 = vpop.trf.xlu0
        %v760 = vpop.trf.xlu0
        %v761 = vpop.trf.xlu0
        %v762 = vpop.trf.xlu0
        %v763 = vpop.trf.xlu0
        %v764 = vpop.trf.xlu0
        %v765 = vpop.trf.xlu0
        %v766 = vpop.trf.xlu0
        %v769 = vcombine.low %v719, %v751
        %v771 = vunpack.c.l.s4 1966171168
        %v772 = vunpack.c.0.s8 %v771
        %v773 = vlaneseq
        %v774 = vshrl.u32 %v773, 7
        %v775 = vsub.s32 %v772, %v774
        %v776 = vrot.slane %v769, %v775
        %v778 = vunpack.c.l.s4 1966171168
        %v779 = vunpack.c.0.s8 %v778
        %v780 = vlaneseq
        %v781 = vshrl.u32 %v780, 7
        %v782 = vsub.s32 %v779, %v781
        %v783 = vrot.slane %v776, %v782
        %v785 = vlaneseq
        %vm786 = vcmp.ge.s32.totalorder %v785, 0
        %vm787 = vcmp.lt.s32.totalorder %v785, 256
        %vm788 = vmand %vm786, %vm787
        %789 = vst.msk [vmem:[%s254] sm:$0x3] %vm788, %v783
        %s790 = sand.u32 %s104, 1
        %s791 = scalar_lea.sflag [#allocation4], %s790
        %s792 = sand.u32 %s104, 1
        %s793 = smul.addr %s792, 2
        %s794 = scalar_lea.vmem [#allocation8], %s793
        // Predicated region
        $region45: #{tpu_custom_call.1} parent=31 // pred_check
          %p795 = pneg %p114
        $region46: #{tpu_custom_call.1} parent=31 // pred_check_branch
          %797 = sbr.rel (%p795) target = $region48
        $region47: #{tpu_custom_call.1} parent=31 // pred_region
          %s798 = smul.u32 2, %s23
          %s799 = ssub.s32 3, %s798
          %p800 = scmp.lt.s32.totalorder %s799, 2
          %s801 = scalar_select %p800, %s799, 2
          %s802 = smul.u32 16, %s801
          %s804 = ssub.s32 32, %s802
          %805 = vsyncadd %s791, %s804
          %p806 = scmp.ne.s32.totalorder 0, %s802
          %s807 = smul.addr %s798, 16
          %s808 = scalar_lea.hbm %s3, %s807
          %s809 = sshll.u32 %s801, 4
          %s810 = sshll.u32 %s794, 4
          %s811 = int_to_ptr.vmem [resolvable:$true] %s810
          %813 = dma.vmem_to_hbm [thread:$0]  (%p806), %s811, %s809, %s808, %s791
        $region48: #{tpu_custom_call.1} parent=31 // pred_fallthru
          _
      $region32: #{tpu_custom_call.1} parent=5 // pred_fallthru
        _
      %p814 = scmp.le.s32.totalorder 2, %s18
      // Predicated region
      $region49: #{tpu_custom_call.1} parent=5 // pred_check
        %p815 = pneg %p814
      $region50: #{tpu_custom_call.1} parent=5 // pred_check_branch
        %817 = sbr.rel (%p815) target = $region52
      $region51: #{tpu_custom_call.1} parent=5 // pred_region
        %s818 = ssub.s32 %s18, 2
        // Predicated region
        $region53: #{tpu_custom_call.1} parent=51 // pred_check
          %p819 = pneg %p120
        $region54: #{tpu_custom_call.1} parent=51 // pred_check_branch
          %821 = sbr.rel (%p819) target = $region56
        $region55: #{tpu_custom_call.1} parent=51 // pred_region
          %s822 = sand.u32 %s105, 1
          %s823 = scalar_lea.sflag [#allocation4], %s822
          %s824 = sand.u32 %s105, 1
          %s825 = smul.addr %s824, 2
          %s826 = scalar_lea.vmem [#allocation8], %s825
          %827 = dma.done %s823, 32
        $region56: #{tpu_custom_call.1} parent=51 // pred_fallthru
          _
      $region52: #{tpu_custom_call.1} parent=5 // pred_fallthru
        _
    $region6: #{tpu_custom_call.1} parent=1 // loop_footer
      %s22 = sadd.s32 1, %s18
    $region7: #{tpu_custom_call.1} parent=1 // loop_footer_branch
      %17 = sbr.rel target = $region3
    $region8: #{tpu_custom_call.1} parent=1 // loop_exit
      _
    %828 = vsyncpa [#allocation3], 1
    %s829 = scalar_lea.sflag [#allocation3], 1
    %830 = vsyncpa %s829, 1
    %831 = vsyncpa [#allocation6], 1
    %s832 = scalar_lea.sflag [#allocation6], 1
    %833 = vsyncpa %s832, 1
    %834 = vsyncpa [#allocation4], 1
    %s835 = scalar_lea.sflag [#allocation4], 1
    %836 = vsyncpa %s835, 1

</llo_original>
